<compile_context>
chip_gen: v7x
topology: tpu7x:2x2x1
jax: 0.10.0
libtpu: 0.0.40
codegen_flags: <defaults>
</compile_context>

<pallas_src>
import functools

import jax
import jax.numpy as jnp
from jax.experimental import pallas as pl
from jax.experimental.pallas import tpu as pltpu


def _round_up(x, m):
    return (x + m - 1) // m * m


_VMEM_CAP = None


def _vmem_capacity_bytes():
    """Generation-aware VMEM capacity (v5e/v6e 128 MiB, v7x 64 MiB) with fallback."""
    global _VMEM_CAP
    if _VMEM_CAP is None:
        try:
            _VMEM_CAP = int(pltpu.get_tpu_info().vmem_capacity_bytes)
        except Exception:
            _VMEM_CAP = 64 * 1024 * 1024
    return _VMEM_CAP


def _choose_k_tiling(K):
    tk = min(_round_up(K, 128), 2048)
    return tk, _round_up(K, tk)


# ----------------------------------------------------------------------------
# Kernel 1: embedding lookup
# ----------------------------------------------------------------------------
_GATHER_ROWS = 32     # tokens per grid step (was 8): >= 4 KB moved per writeback


def _embedding_vmem_kernel(ids_ref, table_ref, out_ref, *, rows, pack, embed):
    # Table resident in VMEM; per-token dynamic row reads; lane-dense packed out.
    base = pl.program_id(0) * rows
    for pr in range(rows // pack):              # static unroll
        for j in range(pack):
            row = ids_ref[base + pr * pack + j]              # SMEM scalar read
            vals = table_ref[pl.ds(row, 1), :]               # (1, E) VMEM read
            out_ref[pl.ds(pr, 1), pl.ds(j * embed, embed)] = vals


def _embedding_hbm_kernel(ids_ref, table_ref, out_ref, sems, *, rows):
    # Fallback for tables too large for VMEM: per-row HBM->VMEM DMA gather.
    base = pl.program_id(0) * rows
    copies = []
    for r in range(rows):                        # static unroll, overlapped DMAs
        row = ids_ref[base + r]
        cp = pltpu.make_async_copy(
            table_ref.at[pl.ds(row, 1), :],      # one row from the HBM table
            out_ref.at[pl.ds(r, 1), :],          # into the VMEM output block
            sems.at[r])
        cp.start()
        copies.append(cp)
    for cp in copies:
        cp.wait()


def embedding_lookup(ids_2d, table_padded, use_vmem_table):
    """ids_2d: (B, T) int32 -> (B, T, E); bit-exact rows of the embedding table."""
    B, T = ids_2d.shape
    Vp, E = table_padded.shape
    n = B * T
    rows = _GATHER_ROWS
    quota = 2 * rows                              # even grid -> both v7x TCs busy
    n_pad = _round_up(max(n, quota), quota)
    flat_ids = jnp.zeros((n_pad,), jnp.int32).at[:n].set(
        ids_2d.reshape(n).astype(jnp.int32))
    grid = (n_pad // rows,)
    itemsize = jnp.dtype(table_padded.dtype).itemsize

    if use_vmem_table:
        pack = 128 // E if (E < 128 and 128 % E == 0) else 1
        if rows % pack != 0:
            pack = 1
        kernel = functools.partial(_embedding_vmem_kernel,
                                   rows=rows, pack=pack, embed=E)
        out = pl.pallas_call(
            kernel,
            out_shape=jax.ShapeDtypeStruct((n_pad // pack, pack * E),
                                           table_padded.dtype),
            grid_spec=pltpu.PrefetchScalarGridSpec(
                num_scalar_prefetch=1,                         # ids -> SMEM
                grid=grid,
                in_specs=[pl.BlockSpec((Vp, E), lambda g, ids: (0, 0))],  # table in VMEM
                out_specs=pl.BlockSpec((rows // pack, pack * E),
                                       lambda g, ids: (g, 0)),
            ),
            compiler_params=pltpu.CompilerParams(
                dimension_semantics=("parallel",)),
            cost_estimate=pl.CostEstimate(
                flops=0, transcendentals=0,
                bytes_accessed=int(Vp * E * itemsize
                                   + 2 * n_pad * E * itemsize + 4 * n_pad)),
        )(flat_ids, table_padded)
        rows_out = out.reshape(n_pad, E)
    else:
        kernel = functools.partial(_embedding_hbm_kernel, rows=rows)
        rows_out = pl.pallas_call(
            kernel,
            out_shape=jax.ShapeDtypeStruct((n_pad, E), table_padded.dtype),
            grid_spec=pltpu.PrefetchScalarGridSpec(
                num_scalar_prefetch=1,
                grid=grid,
                in_specs=[pl.BlockSpec(memory_space=pl.ANY)],  # table stays in HBM
                out_specs=pl.BlockSpec((rows, E), lambda g, ids: (g, 0)),
                scratch_shapes=[pltpu.SemaphoreType.DMA((rows,))],
            ),
            compiler_params=pltpu.CompilerParams(
                dimension_semantics=("parallel",)),
            cost_estimate=pl.CostEstimate(
                flops=0, transcendentals=0,
                bytes_accessed=int(2 * n_pad * E * itemsize + 4 * n_pad)),
        )(flat_ids, table_padded)

    return rows_out[:n].reshape(B, T, E)


# ----------------------------------------------------------------------------
# Kernel 2: fused  init Linear (K-tiled) -> BatchNorm1d (real-B stats) -> LSTMCell
#           with zero initial state; only (i, g, o) gates (f is dead).
# ----------------------------------------------------------------------------
def _init_step_kernel(enc_ref, w_init_ref, b_init_ref, gamma_ref, beta_ref,
                      w_gates_ref, b_gates_ref, h_ref, c_ref, acc_ref,
                      *, batch_real):
    k = pl.program_id(0)

    @pl.when(k == 0)
    def _():
        acc_ref[...] = jnp.zeros_like(acc_ref)

    # Linear partial product: (Bp, TK)bf16 @ (TK, Ep)bf16 -> f32 accumulate
    acc_ref[...] += jnp.dot(enc_ref[...], w_init_ref[...],
                            preferred_element_type=jnp.float32)

    @pl.when(k == pl.num_programs(0) - 1)
    def _():
        x = acc_ref[...] + b_init_ref[...]
        bp = x.shape[0]
        # BN over the *real* batch rows only (padded rows masked out).
        rmask = (jax.lax.broadcasted_iota(jnp.int32, (bp, 1), 0)
                 < batch_real).astype(jnp.float32)
        inv_b = 1.0 / batch_real
        mean = jnp.sum(x * rmask, axis=0, keepdims=True) * inv_b
        xc = (x - mean) * rmask
        var = jnp.sum(xc * xc, axis=0, keepdims=True) * inv_b     # biased var
        y = gamma_ref[...] * (x - mean) * jax.lax.rsqrt(var + 1e-5) + beta_ref[...]

        # LSTMCell with h0 = c0 = 0: only (i, g, o) gates matter (f * c0 == 0).
        gates = (jnp.dot(y.astype(w_gates_ref.dtype), w_gates_ref[...],
                         preferred_element_type=jnp.float32) + b_gates_ref[...])
        dp = h_ref.shape[1]                       # multiple of 128 -> aligned
        i_g = jax.nn.sigmoid(gates[:, 0 * dp:1 * dp])
        g_g = jnp.tanh(gates[:, 1 * dp:2 * dp])
        o_g = jax.nn.sigmoid(gates[:, 2 * dp:3 * dp])
        c_new = i_g * g_g
        h_ref[...] = o_g * jnp.tanh(c_new)
        c_ref[...] = c_new


def init_decode_step(enc_flat, prep, decoder_dim):
    B, K = enc_flat.shape
    f32 = jnp.float32
    Kp, Ep = prep["w_init"].shape
    Dp = prep["w_gates"].shape[1] // 3
    tk, kp_check = _choose_k_tiling(K)
    assert kp_check == Kp
    Bp = _round_up(B, 16)          # bf16 sublane quantum; covers f32's 8 too

    enc_pad = jnp.zeros((Bp, Kp), jnp.bfloat16).at[:B, :K].set(
        enc_flat.astype(jnp.bfloat16))

    kernel = functools.partial(_init_step_kernel, batch_real=B)
    flops = 2 * Bp * Kp * Ep + 2 * Bp * Ep * 3 * Dp
    bytes_acc = ((enc_pad.size + prep["w_init"].size + prep["w_gates"].size) * 2
                 + (3 * Ep + 3 * Dp + 2 * Bp * Dp + Bp * Ep) * 4)

    h_pad, c_pad = pl.pallas_call(
        kernel,
        out_shape=(jax.ShapeDtypeStruct((Bp, Dp), f32),
                   jax.ShapeDtypeStruct((Bp, Dp), f32)),
        grid_spec=pltpu.PrefetchScalarGridSpec(
            num_scalar_prefetch=0,
            grid=(Kp // tk,),
            in_specs=[
                pl.BlockSpec((Bp, tk), lambda k: (0, k)),       # enc (bf16)
                pl.BlockSpec((tk, Ep), lambda k: (k, 0)),       # w_init (bf16)
                pl.BlockSpec((1, Ep), lambda k: (0, 0)),        # b_init
                pl.BlockSpec((1, Ep), lambda k: (0, 0)),        # gamma
                pl.BlockSpec((1, Ep), lambda k: (0, 0)),        # beta
                pl.BlockSpec((Ep, 3 * Dp), lambda k: (0, 0)),   # w_gates (bf16)
                pl.BlockSpec((1, 3 * Dp), lambda k: (0, 0)),    # b_gates
            ],
            out_specs=(pl.BlockSpec((Bp, Dp), lambda k: (0, 0)),
                       pl.BlockSpec((Bp, Dp), lambda k: (0, 0))),
            scratch_shapes=[pltpu.VMEM((Bp, Ep), f32)],
        ),
        compiler_params=pltpu.CompilerParams(
            dimension_semantics=("arbitrary",),
            vmem_limit_bytes=32 * 1024 * 1024),
        cost_estimate=pl.CostEstimate(flops=int(flops),
                                      transcendentals=int(6 * Bp * Dp),
                                      bytes_accessed=int(bytes_acc)),
    )(enc_pad, prep["w_init"], prep["b_init"], prep["gamma"], prep["beta"],
      prep["w_gates"], prep["b_gates"])

    return h_pad[:B, :decoder_dim], c_pad[:B, :decoder_dim]


# ----------------------------------------------------------------------------
# One-time parameter preparation (hoisted out of the per-call path)
# ----------------------------------------------------------------------------
def prepare_decoder_params(params):
    f32, bf16 = jnp.float32, jnp.bfloat16
    emb = params["emb"].astype(f32)
    V, E = emb.shape
    D = params["w_ih"].shape[0] // 4
    K = params["w_init"].shape[1]

    Ep = _round_up(E, 128)
    Dp = _round_up(D, 128)
    _, Kp = _choose_k_tiling(K)
    Vp = _round_up(V, 8)

    emb_p = jnp.zeros((Vp, E), f32).at[:V, :].set(emb)

    w_init_t = jnp.zeros((Kp, Ep), f32).at[:K, :E].set(params["w_init"].T.astype(f32))
    b_init = jnp.zeros((1, Ep), f32).at[:, :E].set(params["b_init"].astype(f32))
    gamma = jnp.zeros((1, Ep), f32).at[:, :E].set(params["bn_gamma"].astype(f32))
    beta = jnp.zeros((1, Ep), f32).at[:, :E].set(params["bn_beta"].astype(f32))

    w_ih = params["w_ih"].astype(f32)                 # (4D, E), PyTorch (i,f,g,o)
    b_all = (params["b_ih"] + params["b_hh"]).astype(f32)

    def gate(idx):
        w = jnp.zeros((Ep, Dp), f32).at[:E, :D].set(w_ih[idx * D:(idx + 1) * D, :].T)
        b = jnp.zeros((1, Dp), f32).at[:, :D].set(b_all[:, idx * D:(idx + 1) * D])
        return w, b

    w_i, b_i = gate(0)          # input gate
    w_g, b_g = gate(2)          # cell candidate
    w_o, b_o = gate(3)          # output gate (forget gate idx=1 is dead)

    prep = {
        "emb": emb_p,
        "w_init": w_init_t.astype(bf16),
        "b_init": b_init, "gamma": gamma, "beta": beta,
        "w_gates": jnp.concatenate([w_i, w_g, w_o], axis=1).astype(bf16),
        "b_gates": jnp.concatenate([b_i, b_g, b_o], axis=1),
    }

    # Generation-aware choice of embedding path (VMEM footprint is lane-padded).
    table_vmem_bytes = Vp * _round_up(E, 128) * emb_p.dtype.itemsize
    use_vmem_table = table_vmem_bytes <= min(8 << 20, _vmem_capacity_bytes() // 8)

    cfg = dict(embed_dim=E, decoder_dim=D, vocab_size=V, encoder_dim=K,
               use_vmem_table=bool(use_vmem_table))
    return prep, cfg


# ----------------------------------------------------------------------------
# Full forward (mirrors DecoderWithRNN.forward)
# ----------------------------------------------------------------------------
@functools.partial(jax.jit, static_argnames=("decoder_dim", "use_vmem_table"))
def _device_forward(prep, encoder_out, encoded_captions, caption_lengths, *,
                    decoder_dim, use_vmem_table):
    B = encoder_out.shape[0]
    enc_flat = encoder_out.reshape(B, -1).astype(jnp.float32)

    lengths = caption_lengths[:, 0]
    sort_ind = jnp.argsort(-lengths)               # descending, like torch.sort
    lengths_sorted = lengths[sort_ind]
    enc_sorted = enc_flat[sort_ind]
    caps_sorted = encoded_captions[sort_ind]

    embeddings = embedding_lookup(caps_sorted, prep["emb"], use_vmem_table)
    h, c = init_decode_step(enc_sorted, prep, decoder_dim)
    return lengths_sorted, caps_sorted, sort_ind, embeddings, h, c


def decoder_forward(prep, cfg, encoder_out, encoded_captions, caption_lengths):
    B = encoder_out.shape[0]
    lengths_sorted, caps_sorted, sort_ind, embeddings, h, c = _device_forward(
        prep, encoder_out, encoded_captions, caption_lengths,
        decoder_dim=cfg["decoder_dim"], use_vmem_table=cfg["use_vmem_table"])

    # Host sync only after the single fused device dispatch is in flight.
    decode_lengths = jax.device_get(lengths_sorted - 1).tolist()
    max_dec = max(decode_lengths)
    predictions = jnp.zeros((B, max_dec, cfg["vocab_size"]), jnp.float32)
    # TODO(synk): the reference forward never runs the per-timestep decode loop
    # or the fc head, so predictions stay zero exactly as in the PyTorch module.
    return predictions, caps_sorted, decode_lengths, sort_ind, (embeddings, h, c)


# ----------------------------------------------------------------------------
# Deterministic parameter construction
# ----------------------------------------------------------------------------
def make_params(key, encoder_dim, embed_dim, decoder_dim, vocab_size):
    ks = jax.random.split(key, 6)
    u = lambda k, shape, s: jax.random.uniform(k, shape, jnp.float32, -s, s)
    return {
        "emb": u(ks[0], (vocab_size, embed_dim), 0.1),
        "fc_w": u(ks[1], (vocab_size, decoder_dim), 0.1),
        "fc_b": jnp.zeros((vocab_size,), jnp.float32),
        "w_init": u(ks[2], (embed_dim, encoder_dim), 0.05),
        "b_init": u(ks[3], (1, embed_dim), 0.05),
        "bn_gamma": jnp.ones((1, embed_dim), jnp.float32),
        "bn_beta": jnp.zeros((1, embed_dim), jnp.float32),
        "w_ih": u(ks[4], (4 * decoder_dim, embed_dim), 0.05),
        "b_ih": u(ks[5], (1, 4 * decoder_dim), 0.05),
        "b_hh": jnp.zeros((1, 4 * decoder_dim), jnp.float32),
        # w_hh unused in this forward (zero initial hidden state)
    }


if __name__ == "__main__":
    import numpy as np

    key = jax.random.PRNGKey(0)
    k_enc, k_cap, k_len, k_par = jax.random.split(key, 4)

    # small shapes consistent with the module
    B, enc_img, enc_ch = 4, 4, 32                # encoder_dim = 4*4*32 = 512
    encoder_dim = enc_img * enc_img * enc_ch
    embed_dim, decoder_dim, vocab_size, seq = 32, 32, 50, 8

    encoder_out = jax.random.normal(k_enc, (B, enc_img, enc_img, enc_ch), jnp.float32)
    encoded_captions = jax.random.randint(k_cap, (B, seq), 0, vocab_size, jnp.int32)
    caption_lengths = jax.random.randint(k_len, (B, 1), 2, seq + 1, jnp.int32)

    params = make_params(k_par, encoder_dim, embed_dim, decoder_dim, vocab_size)
    prep, cfg = prepare_decoder_params(params)      # one-time weight prep

    preds, caps_sorted, decode_lengths, sort_ind, (emb, h, c) = decoder_forward(
        prep, cfg, encoder_out, encoded_captions, caption_lengths)

    jax.block_until_ready((preds, caps_sorted, sort_ind, emb, h, c))

    assert preds.shape == (B, max(decode_lengths), vocab_size)
    assert emb.shape == (B, seq, embed_dim)
    assert h.shape == (B, decoder_dim) and c.shape == (B, decoder_dim)

    # sanity 1: gathered embeddings must match table rows bit-exactly
    emb_np = np.asarray(emb)
    table_np = np.asarray(params["emb"])
    caps_np = np.asarray(caps_sorted)
    assert np.array_equal(emb_np, table_np[caps_np])

    # sanity 2: h, c vs a pure-numpy f32 reference (bf16 matmul tolerance)
    sort_np = np.asarray(sort_ind)
    enc_np = np.asarray(encoder_out, np.float32).reshape(B, -1)[sort_np]
    x = enc_np @ np.asarray(params["w_init"]).T + np.asarray(params["b_init"])
    mean = x.mean(0, keepdims=True)
    var = ((x - mean) ** 2).mean(0, keepdims=True)
    y = (np.asarray(params["bn_gamma"]) * (x - mean) / np.sqrt(var + 1e-5)
         + np.asarray(params["bn_beta"]))
    gates = y @ np.asarray(params["w_ih"]).T + np.asarray(params["b_ih"] + params["b_hh"])
    D = decoder_dim
    sig = lambda v: 1.0 / (1.0 + np.exp(-v))
    i_g = sig(gates[:, 0 * D:1 * D])
    g_g = np.tanh(gates[:, 2 * D:3 * D])
    o_g = sig(gates[:, 3 * D:4 * D])
    c_ref = i_g * g_g
    h_ref = o_g * np.tanh(c_ref)
    assert np.allclose(np.asarray(h), h_ref, atol=2e-2, rtol=2e-2)
    assert np.allclose(np.asarray(c), c_ref, atol=2e-2, rtol=2e-2)

    print("KERNEL_OK")
</pallas_src>

<mosaic_0001>
module attributes {stable_mosaic.version = 11 : i64} {
  func.func @_init_step_kernel(%arg0: i32, %arg1: memref<16x512xbf16, #tpu.memory_space<vmem>>, %arg2: memref<512x128xbf16, #tpu.memory_space<vmem>>, %arg3: memref<1x128xf32, #tpu.memory_space<vmem>>, %arg4: memref<1x128xf32, #tpu.memory_space<vmem>>, %arg5: memref<1x128xf32, #tpu.memory_space<vmem>>, %arg6: memref<128x384xbf16, #tpu.memory_space<vmem>>, %arg7: memref<1x384xf32, #tpu.memory_space<vmem>>, %arg8: memref<16x128xf32, #tpu.memory_space<vmem>>, %arg9: memref<16x128xf32, #tpu.memory_space<vmem>>, %arg10: memref<16x128xf32, #tpu.memory_space<vmem>>) attributes {dimension_semantics = [#tpu.dimension_semantics<arbitrary>], iteration_bounds = array<i64: 1>, scalar_prefetch = 0 : i64, scratch_operands = 1 : i64, tpu.core_type = #tpu.core_type<tc>, window_params = [{transform_indices = @transform_0, window_bounds = array<i64: 16, 512>}, {transform_indices = @transform_1, window_bounds = array<i64: 512, 128>}, {pipeline_mode = #tpu.pipeline_mode<synchronous>, transform_indices = @transform_2, window_bounds = array<i64: 1, 128>}, {pipeline_mode = #tpu.pipeline_mode<synchronous>, transform_indices = @transform_3, window_bounds = array<i64: 1, 128>}, {pipeline_mode = #tpu.pipeline_mode<synchronous>, transform_indices = @transform_4, window_bounds = array<i64: 1, 128>}, {pipeline_mode = #tpu.pipeline_mode<synchronous>, transform_indices = @transform_5, window_bounds = array<i64: 128, 384>}, {pipeline_mode = #tpu.pipeline_mode<synchronous>, transform_indices = @transform_6, window_bounds = array<i64: 1, 384>}, {pipeline_mode = #tpu.pipeline_mode<synchronous>, transform_indices = @transform_7, window_bounds = array<i64: 16, 128>}, {pipeline_mode = #tpu.pipeline_mode<synchronous>, transform_indices = @transform_8, window_bounds = array<i64: 16, 128>}]} {
    %c0_i32 = arith.constant 0 : i32
    %0 = arith.cmpi eq, %arg0, %c0_i32 : i32
    %1 = arith.extui %0 : i1 to i32
    %c0_i32_0 = arith.constant 0 : i32
    %2 = arith.cmpi ne, %1, %c0_i32_0 : i32
    scf.if %2 {
      %cst_10 = arith.constant 0.000000e+00 : f32
      %12 = vector.broadcast %cst_10 : f32 to vector<16x128xf32>
      %c0_11 = arith.constant 0 : index
      %c0_12 = arith.constant 0 : index
      %13 = vector.load %arg10[%c0_11, %c0_12] : memref<16x128xf32, #tpu.memory_space<vmem>>, vector<16x128xf32>
      tpu.vector_store %arg10[%c0_11, %c0_12], %12 {strides = array<i32>} : memref<16x128xf32, #tpu.memory_space<vmem>>, vector<16x128xf32>,
    } else {
    }
    %c0 = arith.constant 0 : index
    %c0_1 = arith.constant 0 : index
    %3 = vector.load %arg10[%c0, %c0_1] : memref<16x128xf32, #tpu.memory_space<vmem>>, vector<16x128xf32>
    %c0_2 = arith.constant 0 : index
    %c0_3 = arith.constant 0 : index
    %4 = vector.load %arg1[%c0_2, %c0_3] : memref<16x512xbf16, #tpu.memory_space<vmem>>, vector<16x512xbf16>
    %c0_4 = arith.constant 0 : index
    %c0_5 = arith.constant 0 : index
    %5 = vector.load %arg2[%c0_4, %c0_5] : memref<512x128xbf16, #tpu.memory_space<vmem>>, vector<512x128xbf16>
    %cst = arith.constant dense<0.000000e+00> : vector<16x128xf32>
    %6 = tpu.matmul %4, %5, %cst {dimension_numbers = #tpu.dot_dimension_numbers<[1], [0], [0], [1], [0, 0, 1, 1], [], []>} : vector<16x512xbf16>, vector<512x128xbf16>, vector<16x128xf32> -> vector<16x128xf32>
    %7 = arith.addf %3, %6 : vector<16x128xf32>
    %c0_6 = arith.constant 0 : index
    %c0_7 = arith.constant 0 : index
    %8 = vector.load %arg10[%c0_6, %c0_7] : memref<16x128xf32, #tpu.memory_space<vmem>>, vector<16x128xf32>
    tpu.vector_store %arg10[%c0_6, %c0_7], %7 {strides = array<i32>} : memref<16x128xf32, #tpu.memory_space<vmem>>, vector<16x128xf32>,
    %c0_i32_8 = arith.constant 0 : i32
    %9 = arith.cmpi eq, %arg0, %c0_i32_8 : i32
    %10 = arith.extui %9 : i1 to i32
    %c0_i32_9 = arith.constant 0 : i32
    %11 = arith.cmpi ne, %10, %c0_i32_9 : i32
    scf.if %11 {
      %c0_10 = arith.constant 0 : index
      %c0_11 = arith.constant 0 : index
      %12 = vector.load %arg10[%c0_10, %c0_11] : memref<16x128xf32, #tpu.memory_space<vmem>>, vector<16x128xf32>
      %c0_12 = arith.constant 0 : index
      %c0_13 = arith.constant 0 : index
      %13 = vector.load %arg3[%c0_12, %c0_13] : memref<1x128xf32, #tpu.memory_space<vmem>>, vector<1x128xf32>
      %14 = vector.broadcast %13 : vector<1x128xf32> to vector<16x128xf32>
      %15 = arith.addf %12, %14 : vector<16x128xf32>
      %16 = tpu.iota {dimensions = array<i32: 0>} : vector<16x1xi32>
      %c4_i32 = arith.constant 4 : i32
      %17 = vector.broadcast %c4_i32 : i32 to vector<16x1xi32>
      %18 = arith.cmpi slt, %16, %17 : vector<16x1xi32>
      %19 = arith.extui %18 : vector<16x1xi1> to vector<16x1xi32>
      %20 = arith.sitofp %19 : vector<16x1xi32> to vector<16x1xf32>
      %21 = vector.broadcast %20 : vector<16x1xf32> to vector<16x128xf32>
      %22 = arith.mulf %15, %21 : vector<16x128xf32>
      %cst_14 = arith.constant dense<0.000000e+00> : vector<128xf32>
      %23 = vector.multi_reduction <add>, %22, %cst_14 [0] : vector<16x128xf32> to vector<128xf32>
      %24 = vector.shape_cast %23 : vector<128xf32> to vector<1x128xf32>
      %cst_15 = arith.constant 2.500000e-01 : f32
      %25 = vector.broadcast %cst_15 : f32 to vector<1x128xf32>
      %26 = arith.mulf %24, %25 : vector<1x128xf32>
      %27 = vector.broadcast %26 : vector<1x128xf32> to vector<16x128xf32>
      %28 = arith.subf %15, %27 : vector<16x128xf32>
      %29 = vector.broadcast %20 : vector<16x1xf32> to vector<16x128xf32>
      %30 = arith.mulf %28, %29 : vector<16x128xf32>
      %31 = arith.mulf %30, %30 : vector<16x128xf32>
      %cst_16 = arith.constant dense<0.000000e+00> : vector<128xf32>
      %32 = vector.multi_reduction <add>, %31, %cst_16 [0] : vector<16x128xf32> to vector<128xf32>
      %33 = vector.shape_cast %32 : vector<128xf32> to vector<1x128xf32>
      %cst_17 = arith.constant 2.500000e-01 : f32
      %34 = vector.broadcast %cst_17 : f32 to vector<1x128xf32>
      %35 = arith.mulf %33, %34 : vector<1x128xf32>
      %c0_18 = arith.constant 0 : index
      %c0_19 = arith.constant 0 : index
      %36 = vector.load %arg4[%c0_18, %c0_19] : memref<1x128xf32, #tpu.memory_space<vmem>>, vector<1x128xf32>
      %37 = vector.broadcast %26 : vector<1x128xf32> to vector<16x128xf32>
      %38 = arith.subf %15, %37 : vector<16x128xf32>
      %39 = vector.broadcast %36 : vector<1x128xf32> to vector<16x128xf32>
      %40 = arith.mulf %39, %38 : vector<16x128xf32>
      %cst_20 = arith.constant 9.99999974E-6 : f32
      %41 = vector.broadcast %cst_20 : f32 to vector<1x128xf32>
      %42 = arith.addf %35, %41 : vector<1x128xf32>
      %43 = math.rsqrt %42 : vector<1x128xf32>
      %44 = vector.broadcast %43 : vector<1x128xf32> to vector<16x128xf32>
      %45 = arith.mulf %40, %44 : vector<16x128xf32>
      %c0_21 = arith.constant 0 : index
      %c0_22 = arith.constant 0 : index
      %46 = vector.load %arg5[%c0_21, %c0_22] : memref<1x128xf32, #tpu.memory_space<vmem>>, vector<1x128xf32>
      %47 = vector.broadcast %46 : vector<1x128xf32> to vector<16x128xf32>
      %48 = arith.addf %45, %47 : vector<16x128xf32>
      %49 = arith.truncf %48 : vector<16x128xf32> to vector<16x128xbf16>
      %c0_23 = arith.constant 0 : index
      %c0_24 = arith.constant 0 : index
      %50 = vector.load %arg6[%c0_23, %c0_24] : memref<128x384xbf16, #tpu.memory_space<vmem>>, vector<128x384xbf16>
      %cst_25 = arith.constant dense<0.000000e+00> : vector<16x384xf32>
      %51 = tpu.matmul %49, %50, %cst_25 {dimension_numbers = #tpu.dot_dimension_numbers<[1], [0], [0], [1], [0, 0, 1, 1], [], []>} : vector<16x128xbf16>, vector<128x384xbf16>, vector<16x384xf32> -> vector<16x384xf32>
      %c0_26 = arith.constant 0 : index
      %c0_27 = arith.constant 0 : index
      %52 = vector.load %arg7[%c0_26, %c0_27] : memref<1x384xf32, #tpu.memory_space<vmem>>, vector<1x384xf32>
      %53 = vector.broadcast %52 : vector<1x384xf32> to vector<16x384xf32>
      %54 = arith.addf %51, %53 : vector<16x384xf32>
      %55 = vector.extract_strided_slice %54 {offsets = [0, 0], sizes = [16, 128], strides = [1, 1]} : vector<16x384xf32> to vector<16x128xf32>
      %56 = arith.negf %55 : vector<16x128xf32>
      %57 = math.exp %56 : vector<16x128xf32>
      %cst_28 = arith.constant 1.000000e+00 : f32
      %58 = vector.broadcast %cst_28 : f32 to vector<16x128xf32>
      %59 = arith.addf %58, %57 : vector<16x128xf32>
      %60 = arith.divf %58, %59 : vector<16x128xf32>
      %61 = vector.extract_strided_slice %54 {offsets = [0, 128], sizes = [16, 128], strides = [1, 1]} : vector<16x384xf32> to vector<16x128xf32>
      %62 = math.tanh %61 : vector<16x128xf32>
      %63 = vector.extract_strided_slice %54 {offsets = [0, 256], sizes = [16, 128], strides = [1, 1]} : vector<16x384xf32> to vector<16x128xf32>
      %64 = arith.negf %63 : vector<16x128xf32>
      %65 = math.exp %64 : vector<16x128xf32>
      %cst_29 = arith.constant 1.000000e+00 : f32
      %66 = vector.broadcast %cst_29 : f32 to vector<16x128xf32>
      %67 = arith.addf %66, %65 : vector<16x128xf32>
      %68 = arith.divf %66, %67 : vector<16x128xf32>
      %69 = arith.mulf %60, %62 : vector<16x128xf32>
      %70 = math.tanh %69 : vector<16x128xf32>
      %71 = arith.mulf %68, %70 : vector<16x128xf32>
      %c0_30 = arith.constant 0 : index
      %c0_31 = arith.constant 0 : index
      %72 = vector.load %arg8[%c0_30, %c0_31] : memref<16x128xf32, #tpu.memory_space<vmem>>, vector<16x128xf32>
      tpu.vector_store %arg8[%c0_30, %c0_31], %71 {strides = array<i32>} : memref<16x128xf32, #tpu.memory_space<vmem>>, vector<16x128xf32>,
      %c0_32 = arith.constant 0 : index
      %c0_33 = arith.constant 0 : index
      %73 = vector.load %arg9[%c0_32, %c0_33] : memref<16x128xf32, #tpu.memory_space<vmem>>, vector<16x128xf32>
      tpu.vector_store %arg9[%c0_32, %c0_33], %69 {strides = array<i32>} : memref<16x128xf32, #tpu.memory_space<vmem>>, vector<16x128xf32>,
    } else {
    }
    return
  }
  func.func @transform_0(%arg0: i32) -> (i32, i32) {
    %c0_i32 = arith.constant 0 : i32
    %c0_i32_0 = arith.constant 0 : i32
    return %c0_i32, %arg0 : i32, i32
  }
  func.func @transform_1(%arg0: i32) -> (i32, i32) {
    %c0_i32 = arith.constant 0 : i32
    %c0_i32_0 = arith.constant 0 : i32
    return %arg0, %c0_i32 : i32, i32
  }
  func.func @transform_2(%arg0: i32) -> (i32, i32) {
    %c0_i32 = arith.constant 0 : i32
    %c0_i32_0 = arith.constant 0 : i32
    %c0_i32_1 = arith.constant 0 : i32
    return %c0_i32, %c0_i32_0 : i32, i32
  }
  func.func @transform_3(%arg0: i32) -> (i32, i32) {
    %c0_i32 = arith.constant 0 : i32
    %c0_i32_0 = arith.constant 0 : i32
    %c0_i32_1 = arith.constant 0 : i32
    return %c0_i32, %c0_i32_0 : i32, i32
  }
  func.func @transform_4(%arg0: i32) -> (i32, i32) {
    %c0_i32 = arith.constant 0 : i32
    %c0_i32_0 = arith.constant 0 : i32
    %c0_i32_1 = arith.constant 0 : i32
    return %c0_i32, %c0_i32_0 : i32, i32
  }
  func.func @transform_5(%arg0: i32) -> (i32, i32) {
    %c0_i32 = arith.constant 0 : i32
    %c0_i32_0 = arith.constant 0 : i32
    %c0_i32_1 = arith.constant 0 : i32
    return %c0_i32, %c0_i32_0 : i32, i32
  }
  func.func @transform_6(%arg0: i32) -> (i32, i32) {
    %c0_i32 = arith.constant 0 : i32
    %c0_i32_0 = arith.constant 0 : i32
    %c0_i32_1 = arith.constant 0 : i32
    return %c0_i32, %c0_i32_0 : i32, i32
  }
  func.func @transform_7(%arg0: i32) -> (i32, i32) {
    %c0_i32 = arith.constant 0 : i32
    %c0_i32_0 = arith.constant 0 : i32
    %c0_i32_1 = arith.constant 0 : i32
    return %c0_i32, %c0_i32_0 : i32, i32
  }
  func.func @transform_8(%arg0: i32) -> (i32, i32) {
    %c0_i32 = arith.constant 0 : i32
    %c0_i32_0 = arith.constant 0 : i32
    %c0_i32_1 = arith.constant 0 : i32
    return %c0_i32, %c0_i32_0 : i32, i32
  }
}

module attributes {stable_mosaic.version = 11 : i64} {
  func.func @_embedding_vmem_kernel(%arg0: i32, %arg1: memref<64xi32, #tpu.memory_space<smem>>, %arg2: memref<56x32xf32, #tpu.memory_space<vmem>>, %arg3: memref<8x128xf32, #tpu.memory_space<vmem>>) attributes {dimension_semantics = [#tpu.dimension_semantics<parallel>], iteration_bounds = array<i64: 2>, scalar_prefetch = 1 : i64, scratch_operands = 0 : i64, tpu.core_type = #tpu.core_type<tc>, window_params = [{pipeline_mode = #tpu.pipeline_mode<synchronous>, transform_indices = @transform_0, window_bounds = array<i64: 56, 32>}, {transform_indices = @transform_1, window_bounds = array<i64: 8, 128>}]} {
    %c32_i32 = arith.constant 32 : i32
    %0 = arith.muli %arg0, %c32_i32 : i32
    %c0_i32 = arith.constant 0 : i32
    %1 = arith.addi %0, %c0_i32 : i32
    %c0_i32_0 = arith.constant 0 : i32
    %2 = arith.addi %1, %c0_i32_0 : i32
    %3 = arith.index_cast %2 : i32 to index
    %4 = memref.load %arg1[%3] : memref<64xi32, #tpu.memory_space<smem>>
    %5 = arith.index_cast %4 : i32 to index
    %c0 = arith.constant 0 : index
    %6 = vector.load %arg2[%5, %c0] : memref<56x32xf32, #tpu.memory_space<vmem>>, vector<1x32xf32>
    %c0_1 = arith.constant 0 : index
    %c0_2 = arith.constant 0 : index
    %7 = vector.load %arg3[%c0_1, %c0_2] : memref<8x128xf32, #tpu.memory_space<vmem>>, vector<1x32xf32>
    tpu.vector_store %arg3[%c0_1, %c0_2], %6 {strides = array<i32>} : memref<8x128xf32, #tpu.memory_space<vmem>>, vector<1x32xf32>,
    %c0_i32_3 = arith.constant 0 : i32
    %8 = arith.addi %0, %c0_i32_3 : i32
    %c1_i32 = arith.constant 1 : i32
    %9 = arith.addi %8, %c1_i32 : i32
    %10 = arith.index_cast %9 : i32 to index
    %11 = memref.load %arg1[%10] : memref<64xi32, #tpu.memory_space<smem>>
    %12 = arith.index_cast %11 : i32 to index
    %c0_4 = arith.constant 0 : index
    %13 = vector.load %arg2[%12, %c0_4] : memref<56x32xf32, #tpu.memory_space<vmem>>, vector<1x32xf32>
    %c0_5 = arith.constant 0 : index
    %c32 = arith.constant 32 : index
    %14 = vector.load %arg3[%c0_5, %c32] : memref<8x128xf32, #tpu.memory_space<vmem>>, vector<1x32xf32>
    tpu.vector_store %arg3[%c0_5, %c32], %13 {strides = array<i32>} : memref<8x128xf32, #tpu.memory_space<vmem>>, vector<1x32xf32>,
    %c0_i32_6 = arith.constant 0 : i32
    %15 = arith.addi %0, %c0_i32_6 : i32
    %c2_i32 = arith.constant 2 : i32
    %16 = arith.addi %15, %c2_i32 : i32
    %17 = arith.index_cast %16 : i32 to index
    %18 = memref.load %arg1[%17] : memref<64xi32, #tpu.memory_space<smem>>
    %19 = arith.index_cast %18 : i32 to index
    %c0_7 = arith.constant 0 : index
    %20 = vector.load %arg2[%19, %c0_7] : memref<56x32xf32, #tpu.memory_space<vmem>>, vector<1x32xf32>
    %c0_8 = arith.constant 0 : index
    %c64 = arith.constant 64 : index
    %21 = vector.load %arg3[%c0_8, %c64] : memref<8x128xf32, #tpu.memory_space<vmem>>, vector<1x32xf32>
    tpu.vector_store %arg3[%c0_8, %c64], %20 {strides = array<i32>} : memref<8x128xf32, #tpu.memory_space<vmem>>, vector<1x32xf32>,
    %c0_i32_9 = arith.constant 0 : i32
    %22 = arith.addi %0, %c0_i32_9 : i32
    %c3_i32 = arith.constant 3 : i32
    %23 = arith.addi %22, %c3_i32 : i32
    %24 = arith.index_cast %23 : i32 to index
    %25 = memref.load %arg1[%24] : memref<64xi32, #tpu.memory_space<smem>>
    %26 = arith.index_cast %25 : i32 to index
    %c0_10 = arith.constant 0 : index
    %27 = vector.load %arg2[%26, %c0_10] : memref<56x32xf32, #tpu.memory_space<vmem>>, vector<1x32xf32>
    %c0_11 = arith.constant 0 : index
    %c96 = arith.constant 96 : index
    %28 = vector.load %arg3[%c0_11, %c96] : memref<8x128xf32, #tpu.memory_space<vmem>>, vector<1x32xf32>
    tpu.vector_store %arg3[%c0_11, %c96], %27 {strides = array<i32>} : memref<8x128xf32, #tpu.memory_space<vmem>>, vector<1x32xf32>,
    %c4_i32 = arith.constant 4 : i32
    %29 = arith.addi %0, %c4_i32 : i32
    %c0_i32_12 = arith.constant 0 : i32
    %30 = arith.addi %29, %c0_i32_12 : i32
    %31 = arith.index_cast %30 : i32 to index
    %32 = memref.load %arg1[%31] : memref<64xi32, #tpu.memory_space<smem>>
    %33 = arith.index_cast %32 : i32 to index
    %c0_13 = arith.constant 0 : index
    %34 = vector.load %arg2[%33, %c0_13] : memref<56x32xf32, #tpu.memory_space<vmem>>, vector<1x32xf32>
    %c1 = arith.constant 1 : index
    %c0_14 = arith.constant 0 : index
    %35 = vector.load %arg3[%c1, %c0_14] : memref<8x128xf32, #tpu.memory_space<vmem>>, vector<1x32xf32>
    tpu.vector_store %arg3[%c1, %c0_14], %34 {strides = array<i32>} : memref<8x128xf32, #tpu.memory_space<vmem>>, vector<1x32xf32>,
    %c4_i32_15 = arith.constant 4 : i32
    %36 = arith.addi %0, %c4_i32_15 : i32
    %c1_i32_16 = arith.constant 1 : i32
    %37 = arith.addi %36, %c1_i32_16 : i32
    %38 = arith.index_cast %37 : i32 to index
    %39 = memref.load %arg1[%38] : memref<64xi32, #tpu.memory_space<smem>>
    %40 = arith.index_cast %39 : i32 to index
    %c0_17 = arith.constant 0 : index
    %41 = vector.load %arg2[%40, %c0_17] : memref<56x32xf32, #tpu.memory_space<vmem>>, vector<1x32xf32>
    %c1_18 = arith.constant 1 : index
    %c32_19 = arith.constant 32 : index
    %42 = vector.load %arg3[%c1_18, %c32_19] : memref<8x128xf32, #tpu.memory_space<vmem>>, vector<1x32xf32>
    tpu.vector_store %arg3[%c1_18, %c32_19], %41 {strides = array<i32>} : memref<8x128xf32, #tpu.memory_space<vmem>>, vector<1x32xf32>,
    %c4_i32_20 = arith.constant 4 : i32
    %43 = arith.addi %0, %c4_i32_20 : i32
    %c2_i32_21 = arith.constant 2 : i32
    %44 = arith.addi %43, %c2_i32_21 : i32
    %45 = arith.index_cast %44 : i32 to index
    %46 = memref.load %arg1[%45] : memref<64xi32, #tpu.memory_space<smem>>
    %47 = arith.index_cast %46 : i32 to index
    %c0_22 = arith.constant 0 : index
    %48 = vector.load %arg2[%47, %c0_22] : memref<56x32xf32, #tpu.memory_space<vmem>>, vector<1x32xf32>
    %c1_23 = arith.constant 1 : index
    %c64_24 = arith.constant 64 : index
    %49 = vector.load %arg3[%c1_23, %c64_24] : memref<8x128xf32, #tpu.memory_space<vmem>>, vector<1x32xf32>
    tpu.vector_store %arg3[%c1_23, %c64_24], %48 {strides = array<i32>} : memref<8x128xf32, #tpu.memory_space<vmem>>, vector<1x32xf32>,
    %c4_i32_25 = arith.constant 4 : i32
    %50 = arith.addi %0, %c4_i32_25 : i32
    %c3_i32_26 = arith.constant 3 : i32
    %51 = arith.addi %50, %c3_i32_26 : i32
    %52 = arith.index_cast %51 : i32 to index
    %53 = memref.load %arg1[%52] : memref<64xi32, #tpu.memory_space<smem>>
    %54 = arith.index_cast %53 : i32 to index
    %c0_27 = arith.constant 0 : index
    %55 = vector.load %arg2[%54, %c0_27] : memref<56x32xf32, #tpu.memory_space<vmem>>, vector<1x32xf32>
    %c1_28 = arith.constant 1 : index
    %c96_29 = arith.constant 96 : index
    %56 = vector.load %arg3[%c1_28, %c96_29] : memref<8x128xf32, #tpu.memory_space<vmem>>, vector<1x32xf32>
    tpu.vector_store %arg3[%c1_28, %c96_29], %55 {strides = array<i32>} : memref<8x128xf32, #tpu.memory_space<vmem>>, vector<1x32xf32>,
    %c8_i32 = arith.constant 8 : i32
    %57 = arith.addi %0, %c8_i32 : i32
    %c0_i32_30 = arith.constant 0 : i32
    %58 = arith.addi %57, %c0_i32_30 : i32
    %59 = arith.index_cast %58 : i32 to index
    %60 = memref.load %arg1[%59] : memref<64xi32, #tpu.memory_space<smem>>
    %61 = arith.index_cast %60 : i32 to index
    %c0_31 = arith.constant 0 : index
    %62 = vector.load %arg2[%61, %c0_31] : memref<56x32xf32, #tpu.memory_space<vmem>>, vector<1x32xf32>
    %c2 = arith.constant 2 : index
    %c0_32 = arith.constant 0 : index
    %63 = vector.load %arg3[%c2, %c0_32] : memref<8x128xf32, #tpu.memory_space<vmem>>, vector<1x32xf32>
    tpu.vector_store %arg3[%c2, %c0_32], %62 {strides = array<i32>} : memref<8x128xf32, #tpu.memory_space<vmem>>, vector<1x32xf32>,
    %c8_i32_33 = arith.constant 8 : i32
    %64 = arith.addi %0, %c8_i32_33 : i32
    %c1_i32_34 = arith.constant 1 : i32
    %65 = arith.addi %64, %c1_i32_34 : i32
    %66 = arith.index_cast %65 : i32 to index
    %67 = memref.load %arg1[%66] : memref<64xi32, #tpu.memory_space<smem>>
    %68 = arith.index_cast %67 : i32 to index
    %c0_35 = arith.constant 0 : index
    %69 = vector.load %arg2[%68, %c0_35] : memref<56x32xf32, #tpu.memory_space<vmem>>, vector<1x32xf32>
    %c2_36 = arith.constant 2 : index
    %c32_37 = arith.constant 32 : index
    %70 = vector.load %arg3[%c2_36, %c32_37] : memref<8x128xf32, #tpu.memory_space<vmem>>, vector<1x32xf32>
    tpu.vector_store %arg3[%c2_36, %c32_37], %69 {strides = array<i32>} : memref<8x128xf32, #tpu.memory_space<vmem>>, vector<1x32xf32>,
    %c8_i32_38 = arith.constant 8 : i32
    %71 = arith.addi %0, %c8_i32_38 : i32
    %c2_i32_39 = arith.constant 2 : i32
    %72 = arith.addi %71, %c2_i32_39 : i32
    %73 = arith.index_cast %72 : i32 to index
    %74 = memref.load %arg1[%73] : memref<64xi32, #tpu.memory_space<smem>>
    %75 = arith.index_cast %74 : i32 to index
    %c0_40 = arith.constant 0 : index
    %76 = vector.load %arg2[%75, %c0_40] : memref<56x32xf32, #tpu.memory_space<vmem>>, vector<1x32xf32>
    %c2_41 = arith.constant 2 : index
    %c64_42 = arith.constant 64 : index
    %77 = vector.load %arg3[%c2_41, %c64_42] : memref<8x128xf32, #tpu.memory_space<vmem>>, vector<1x32xf32>
    tpu.vector_store %arg3[%c2_41, %c64_42], %76 {strides = array<i32>} : memref<8x128xf32, #tpu.memory_space<vmem>>, vector<1x32xf32>,
    %c8_i32_43 = arith.constant 8 : i32
    %78 = arith.addi %0, %c8_i32_43 : i32
    %c3_i32_44 = arith.constant 3 : i32
    %79 = arith.addi %78, %c3_i32_44 : i32
    %80 = arith.index_cast %79 : i32 to index
    %81 = memref.load %arg1[%80] : memref<64xi32, #tpu.memory_space<smem>>
    %82 = arith.index_cast %81 : i32 to index
    %c0_45 = arith.constant 0 : index
    %83 = vector.load %arg2[%82, %c0_45] : memref<56x32xf32, #tpu.memory_space<vmem>>, vector<1x32xf32>
    %c2_46 = arith.constant 2 : index
    %c96_47 = arith.constant 96 : index
    %84 = vector.load %arg3[%c2_46, %c96_47] : memref<8x128xf32, #tpu.memory_space<vmem>>, vector<1x32xf32>
    tpu.vector_store %arg3[%c2_46, %c96_47], %83 {strides = array<i32>} : memref<8x128xf32, #tpu.memory_space<vmem>>, vector<1x32xf32>,
    %c12_i32 = arith.constant 12 : i32
    %85 = arith.addi %0, %c12_i32 : i32
    %c0_i32_48 = arith.constant 0 : i32
    %86 = arith.addi %85, %c0_i32_48 : i32
    %87 = arith.index_cast %86 : i32 to index
    %88 = memref.load %arg1[%87] : memref<64xi32, #tpu.memory_space<smem>>
    %89 = arith.index_cast %88 : i32 to index
    %c0_49 = arith.constant 0 : index
    %90 = vector.load %arg2[%89, %c0_49] : memref<56x32xf32, #tpu.memory_space<vmem>>, vector<1x32xf32>
    %c3 = arith.constant 3 : index
    %c0_50 = arith.constant 0 : index
    %91 = vector.load %arg3[%c3, %c0_50] : memref<8x128xf32, #tpu.memory_space<vmem>>, vector<1x32xf32>
    tpu.vector_store %arg3[%c3, %c0_50], %90 {strides = array<i32>} : memref<8x128xf32, #tpu.memory_space<vmem>>, vector<1x32xf32>,
    %c12_i32_51 = arith.constant 12 : i32
    %92 = arith.addi %0, %c12_i32_51 : i32
    %c1_i32_52 = arith.constant 1 : i32
    %93 = arith.addi %92, %c1_i32_52 : i32
    %94 = arith.index_cast %93 : i32 to index
    %95 = memref.load %arg1[%94] : memref<64xi32, #tpu.memory_space<smem>>
    %96 = arith.index_cast %95 : i32 to index
    %c0_53 = arith.constant 0 : index
    %97 = vector.load %arg2[%96, %c0_53] : memref<56x32xf32, #tpu.memory_space<vmem>>, vector<1x32xf32>
    %c3_54 = arith.constant 3 : index
    %c32_55 = arith.constant 32 : index
    %98 = vector.load %arg3[%c3_54, %c32_55] : memref<8x128xf32, #tpu.memory_space<vmem>>, vector<1x32xf32>
    tpu.vector_store %arg3[%c3_54, %c32_55], %97 {strides = array<i32>} : memref<8x128xf32, #tpu.memory_space<vmem>>, vector<1x32xf32>,
    %c12_i32_56 = arith.constant 12 : i32
    %99 = arith.addi %0, %c12_i32_56 : i32
    %c2_i32_57 = arith.constant 2 : i32
    %100 = arith.addi %99, %c2_i32_57 : i32
    %101 = arith.index_cast %100 : i32 to index
    %102 = memref.load %arg1[%101] : memref<64xi32, #tpu.memory_space<smem>>
    %103 = arith.index_cast %102 : i32 to index
    %c0_58 = arith.constant 0 : index
    %104 = vector.load %arg2[%103, %c0_58] : memref<56x32xf32, #tpu.memory_space<vmem>>, vector<1x32xf32>
    %c3_59 = arith.constant 3 : index
    %c64_60 = arith.constant 64 : index
    %105 = vector.load %arg3[%c3_59, %c64_60] : memref<8x128xf32, #tpu.memory_space<vmem>>, vector<1x32xf32>
    tpu.vector_store %arg3[%c3_59, %c64_60], %104 {strides = array<i32>} : memref<8x128xf32, #tpu.memory_space<vmem>>, vector<1x32xf32>,
    %c12_i32_61 = arith.constant 12 : i32
    %106 = arith.addi %0, %c12_i32_61 : i32
    %c3_i32_62 = arith.constant 3 : i32
    %107 = arith.addi %106, %c3_i32_62 : i32
    %108 = arith.index_cast %107 : i32 to index
    %109 = memref.load %arg1[%108] : memref<64xi32, #tpu.memory_space<smem>>
    %110 = arith.index_cast %109 : i32 to index
    %c0_63 = arith.constant 0 : index
    %111 = vector.load %arg2[%110, %c0_63] : memref<56x32xf32, #tpu.memory_space<vmem>>, vector<1x32xf32>
    %c3_64 = arith.constant 3 : index
    %c96_65 = arith.constant 96 : index
    %112 = vector.load %arg3[%c3_64, %c96_65] : memref<8x128xf32, #tpu.memory_space<vmem>>, vector<1x32xf32>
    tpu.vector_store %arg3[%c3_64, %c96_65], %111 {strides = array<i32>} : memref<8x128xf32, #tpu.memory_space<vmem>>, vector<1x32xf32>,
    %c16_i32 = arith.constant 16 : i32
    %113 = arith.addi %0, %c16_i32 : i32
    %c0_i32_66 = arith.constant 0 : i32
    %114 = arith.addi %113, %c0_i32_66 : i32
    %115 = arith.index_cast %114 : i32 to index
    %116 = memref.load %arg1[%115] : memref<64xi32, #tpu.memory_space<smem>>
    %117 = arith.index_cast %116 : i32 to index
    %c0_67 = arith.constant 0 : index
    %118 = vector.load %arg2[%117, %c0_67] : memref<56x32xf32, #tpu.memory_space<vmem>>, vector<1x32xf32>
    %c4 = arith.constant 4 : index
    %c0_68 = arith.constant 0 : index
    %119 = vector.load %arg3[%c4, %c0_68] : memref<8x128xf32, #tpu.memory_space<vmem>>, vector<1x32xf32>
    tpu.vector_store %arg3[%c4, %c0_68], %118 {strides = array<i32>} : memref<8x128xf32, #tpu.memory_space<vmem>>, vector<1x32xf32>,
    %c16_i32_69 = arith.constant 16 : i32
    %120 = arith.addi %0, %c16_i32_69 : i32
    %c1_i32_70 = arith.constant 1 : i32
    %121 = arith.addi %120, %c1_i32_70 : i32
    %122 = arith.index_cast %121 : i32 to index
    %123 = memref.load %arg1[%122] : memref<64xi32, #tpu.memory_space<smem>>
    %124 = arith.index_cast %123 : i32 to index
    %c0_71 = arith.constant 0 : index
    %125 = vector.load %arg2[%124, %c0_71] : memref<56x32xf32, #tpu.memory_space<vmem>>, vector<1x32xf32>
    %c4_72 = arith.constant 4 : index
    %c32_73 = arith.constant 32 : index
    %126 = vector.load %arg3[%c4_72, %c32_73] : memref<8x128xf32, #tpu.memory_space<vmem>>, vector<1x32xf32>
    tpu.vector_store %arg3[%c4_72, %c32_73], %125 {strides = array<i32>} : memref<8x128xf32, #tpu.memory_space<vmem>>, vector<1x32xf32>,
    %c16_i32_74 = arith.constant 16 : i32
    %127 = arith.addi %0, %c16_i32_74 : i32
    %c2_i32_75 = arith.constant 2 : i32
    %128 = arith.addi %127, %c2_i32_75 : i32
    %129 = arith.index_cast %128 : i32 to index
    %130 = memref.load %arg1[%129] : memref<64xi32, #tpu.memory_space<smem>>
    %131 = arith.index_cast %130 : i32 to index
    %c0_76 = arith.constant 0 : index
    %132 = vector.load %arg2[%131, %c0_76] : memref<56x32xf32, #tpu.memory_space<vmem>>, vector<1x32xf32>
    %c4_77 = arith.constant 4 : index
    %c64_78 = arith.constant 64 : index
    %133 = vector.load %arg3[%c4_77, %c64_78] : memref<8x128xf32, #tpu.memory_space<vmem>>, vector<1x32xf32>
    tpu.vector_store %arg3[%c4_77, %c64_78], %132 {strides = array<i32>} : memref<8x128xf32, #tpu.memory_space<vmem>>, vector<1x32xf32>,
    %c16_i32_79 = arith.constant 16 : i32
    %134 = arith.addi %0, %c16_i32_79 : i32
    %c3_i32_80 = arith.constant 3 : i32
    %135 = arith.addi %134, %c3_i32_80 : i32
    %136 = arith.index_cast %135 : i32 to index
    %137 = memref.load %arg1[%136] : memref<64xi32, #tpu.memory_space<smem>>
    %138 = arith.index_cast %137 : i32 to index
    %c0_81 = arith.constant 0 : index
    %139 = vector.load %arg2[%138, %c0_81] : memref<56x32xf32, #tpu.memory_space<vmem>>, vector<1x32xf32>
    %c4_82 = arith.constant 4 : index
    %c96_83 = arith.constant 96 : index
    %140 = vector.load %arg3[%c4_82, %c96_83] : memref<8x128xf32, #tpu.memory_space<vmem>>, vector<1x32xf32>
    tpu.vector_store %arg3[%c4_82, %c96_83], %139 {strides = array<i32>} : memref<8x128xf32, #tpu.memory_space<vmem>>, vector<1x32xf32>,
    %c20_i32 = arith.constant 20 : i32
    %141 = arith.addi %0, %c20_i32 : i32
    %c0_i32_84 = arith.constant 0 : i32
    %142 = arith.addi %141, %c0_i32_84 : i32
    %143 = arith.index_cast %142 : i32 to index
    %144 = memref.load %arg1[%143] : memref<64xi32, #tpu.memory_space<smem>>
    %145 = arith.index_cast %144 : i32 to index
    %c0_85 = arith.constant 0 : index
    %146 = vector.load %arg2[%145, %c0_85] : memref<56x32xf32, #tpu.memory_space<vmem>>, vector<1x32xf32>
    %c5 = arith.constant 5 : index
    %c0_86 = arith.constant 0 : index
    %147 = vector.load %arg3[%c5, %c0_86] : memref<8x128xf32, #tpu.memory_space<vmem>>, vector<1x32xf32>
    tpu.vector_store %arg3[%c5, %c0_86], %146 {strides = array<i32>} : memref<8x128xf32, #tpu.memory_space<vmem>>, vector<1x32xf32>,
    %c20_i32_87 = arith.constant 20 : i32
    %148 = arith.addi %0, %c20_i32_87 : i32
    %c1_i32_88 = arith.constant 1 : i32
    %149 = arith.addi %148, %c1_i32_88 : i32
    %150 = arith.index_cast %149 : i32 to index
    %151 = memref.load %arg1[%150] : memref<64xi32, #tpu.memory_space<smem>>
    %152 = arith.index_cast %151 : i32 to index
    %c0_89 = arith.constant 0 : index
    %153 = vector.load %arg2[%152, %c0_89] : memref<56x32xf32, #tpu.memory_space<vmem>>, vector<1x32xf32>
    %c5_90 = arith.constant 5 : index
    %c32_91 = arith.constant 32 : index
    %154 = vector.load %arg3[%c5_90, %c32_91] : memref<8x128xf32, #tpu.memory_space<vmem>>, vector<1x32xf32>
    tpu.vector_store %arg3[%c5_90, %c32_91], %153 {strides = array<i32>} : memref<8x128xf32, #tpu.memory_space<vmem>>, vector<1x32xf32>,
    %c20_i32_92 = arith.constant 20 : i32
    %155 = arith.addi %0, %c20_i32_92 : i32
    %c2_i32_93 = arith.constant 2 : i32
    %156 = arith.addi %155, %c2_i32_93 : i32
    %157 = arith.index_cast %156 : i32 to index
    %158 = memref.load %arg1[%157] : memref<64xi32, #tpu.memory_space<smem>>
    %159 = arith.index_cast %158 : i32 to index
    %c0_94 = arith.constant 0 : index
    %160 = vector.load %arg2[%159, %c0_94] : memref<56x32xf32, #tpu.memory_space<vmem>>, vector<1x32xf32>
    %c5_95 = arith.constant 5 : index
    %c64_96 = arith.constant 64 : index
    %161 = vector.load %arg3[%c5_95, %c64_96] : memref<8x128xf32, #tpu.memory_space<vmem>>, vector<1x32xf32>
    tpu.vector_store %arg3[%c5_95, %c64_96], %160 {strides = array<i32>} : memref<8x128xf32, #tpu.memory_space<vmem>>, vector<1x32xf32>,
    %c20_i32_97 = arith.constant 20 : i32
    %162 = arith.addi %0, %c20_i32_97 : i32
    %c3_i32_98 = arith.constant 3 : i32
    %163 = arith.addi %162, %c3_i32_98 : i32
    %164 = arith.index_cast %163 : i32 to index
    %165 = memref.load %arg1[%164] : memref<64xi32, #tpu.memory_space<smem>>
    %166 = arith.index_cast %165 : i32 to index
    %c0_99 = arith.constant 0 : index
    %167 = vector.load %arg2[%166, %c0_99] : memref<56x32xf32, #tpu.memory_space<vmem>>, vector<1x32xf32>
    %c5_100 = arith.constant 5 : index
    %c96_101 = arith.constant 96 : index
    %168 = vector.load %arg3[%c5_100, %c96_101] : memref<8x128xf32, #tpu.memory_space<vmem>>, vector<1x32xf32>
    tpu.vector_store %arg3[%c5_100, %c96_101], %167 {strides = array<i32>} : memref<8x128xf32, #tpu.memory_space<vmem>>, vector<1x32xf32>,
    %c24_i32 = arith.constant 24 : i32
    %169 = arith.addi %0, %c24_i32 : i32
    %c0_i32_102 = arith.constant 0 : i32
    %170 = arith.addi %169, %c0_i32_102 : i32
    %171 = arith.index_cast %170 : i32 to index
    %172 = memref.load %arg1[%171] : memref<64xi32, #tpu.memory_space<smem>>
    %173 = arith.index_cast %172 : i32 to index
    %c0_103 = arith.constant 0 : index
    %174 = vector.load %arg2[%173, %c0_103] : memref<56x32xf32, #tpu.memory_space<vmem>>, vector<1x32xf32>
    %c6 = arith.constant 6 : index
    %c0_104 = arith.constant 0 : index
    %175 = vector.load %arg3[%c6, %c0_104] : memref<8x128xf32, #tpu.memory_space<vmem>>, vector<1x32xf32>
    tpu.vector_store %arg3[%c6, %c0_104], %174 {strides = array<i32>} : memref<8x128xf32, #tpu.memory_space<vmem>>, vector<1x32xf32>,
    %c24_i32_105 = arith.constant 24 : i32
    %176 = arith.addi %0, %c24_i32_105 : i32
    %c1_i32_106 = arith.constant 1 : i32
    %177 = arith.addi %176, %c1_i32_106 : i32
    %178 = arith.index_cast %177 : i32 to index
    %179 = memref.load %arg1[%178] : memref<64xi32, #tpu.memory_space<smem>>
    %180 = arith.index_cast %179 : i32 to index
    %c0_107 = arith.constant 0 : index
    %181 = vector.load %arg2[%180, %c0_107] : memref<56x32xf32, #tpu.memory_space<vmem>>, vector<1x32xf32>
    %c6_108 = arith.constant 6 : index
    %c32_109 = arith.constant 32 : index
    %182 = vector.load %arg3[%c6_108, %c32_109] : memref<8x128xf32, #tpu.memory_space<vmem>>, vector<1x32xf32>
    tpu.vector_store %arg3[%c6_108, %c32_109], %181 {strides = array<i32>} : memref<8x128xf32, #tpu.memory_space<vmem>>, vector<1x32xf32>,
    %c24_i32_110 = arith.constant 24 : i32
    %183 = arith.addi %0, %c24_i32_110 : i32
    %c2_i32_111 = arith.constant 2 : i32
    %184 = arith.addi %183, %c2_i32_111 : i32
    %185 = arith.index_cast %184 : i32 to index
    %186 = memref.load %arg1[%185] : memref<64xi32, #tpu.memory_space<smem>>
    %187 = arith.index_cast %186 : i32 to index
    %c0_112 = arith.constant 0 : index
    %188 = vector.load %arg2[%187, %c0_112] : memref<56x32xf32, #tpu.memory_space<vmem>>, vector<1x32xf32>
    %c6_113 = arith.constant 6 : index
    %c64_114 = arith.constant 64 : index
    %189 = vector.load %arg3[%c6_113, %c64_114] : memref<8x128xf32, #tpu.memory_space<vmem>>, vector<1x32xf32>
    tpu.vector_store %arg3[%c6_113, %c64_114], %188 {strides = array<i32>} : memref<8x128xf32, #tpu.memory_space<vmem>>, vector<1x32xf32>,
    %c24_i32_115 = arith.constant 24 : i32
    %190 = arith.addi %0, %c24_i32_115 : i32
    %c3_i32_116 = arith.constant 3 : i32
    %191 = arith.addi %190, %c3_i32_116 : i32
    %192 = arith.index_cast %191 : i32 to index
    %193 = memref.load %arg1[%192] : memref<64xi32, #tpu.memory_space<smem>>
    %194 = arith.index_cast %193 : i32 to index
    %c0_117 = arith.constant 0 : index
    %195 = vector.load %arg2[%194, %c0_117] : memref<56x32xf32, #tpu.memory_space<vmem>>, vector<1x32xf32>
    %c6_118 = arith.constant 6 : index
    %c96_119 = arith.constant 96 : index
    %196 = vector.load %arg3[%c6_118, %c96_119] : memref<8x128xf32, #tpu.memory_space<vmem>>, vector<1x32xf32>
    tpu.vector_store %arg3[%c6_118, %c96_119], %195 {strides = array<i32>} : memref<8x128xf32, #tpu.memory_space<vmem>>, vector<1x32xf32>,
    %c28_i32 = arith.constant 28 : i32
    %197 = arith.addi %0, %c28_i32 : i32
    %c0_i32_120 = arith.constant 0 : i32
    %198 = arith.addi %197, %c0_i32_120 : i32
    %199 = arith.index_cast %198 : i32 to index
    %200 = memref.load %arg1[%199] : memref<64xi32, #tpu.memory_space<smem>>
    %201 = arith.index_cast %200 : i32 to index
    %c0_121 = arith.constant 0 : index
    %202 = vector.load %arg2[%201, %c0_121] : memref<56x32xf32, #tpu.memory_space<vmem>>, vector<1x32xf32>
    %c7 = arith.constant 7 : index
    %c0_122 = arith.constant 0 : index
    %203 = vector.load %arg3[%c7, %c0_122] : memref<8x128xf32, #tpu.memory_space<vmem>>, vector<1x32xf32>
    tpu.vector_store %arg3[%c7, %c0_122], %202 {strides = array<i32>} : memref<8x128xf32, #tpu.memory_space<vmem>>, vector<1x32xf32>,
    %c28_i32_123 = arith.constant 28 : i32
    %204 = arith.addi %0, %c28_i32_123 : i32
    %c1_i32_124 = arith.constant 1 : i32
    %205 = arith.addi %204, %c1_i32_124 : i32
    %206 = arith.index_cast %205 : i32 to index
    %207 = memref.load %arg1[%206] : memref<64xi32, #tpu.memory_space<smem>>
    %208 = arith.index_cast %207 : i32 to index
    %c0_125 = arith.constant 0 : index
    %209 = vector.load %arg2[%208, %c0_125] : memref<56x32xf32, #tpu.memory_space<vmem>>, vector<1x32xf32>
    %c7_126 = arith.constant 7 : index
    %c32_127 = arith.constant 32 : index
    %210 = vector.load %arg3[%c7_126, %c32_127] : memref<8x128xf32, #tpu.memory_space<vmem>>, vector<1x32xf32>
    tpu.vector_store %arg3[%c7_126, %c32_127], %209 {strides = array<i32>} : memref<8x128xf32, #tpu.memory_space<vmem>>, vector<1x32xf32>,
    %c28_i32_128 = arith.constant 28 : i32
    %211 = arith.addi %0, %c28_i32_128 : i32
    %c2_i32_129 = arith.constant 2 : i32
    %212 = arith.addi %211, %c2_i32_129 : i32
    %213 = arith.index_cast %212 : i32 to index
    %214 = memref.load %arg1[%213] : memref<64xi32, #tpu.memory_space<smem>>
    %215 = arith.index_cast %214 : i32 to index
    %c0_130 = arith.constant 0 : index
    %216 = vector.load %arg2[%215, %c0_130] : memref<56x32xf32, #tpu.memory_space<vmem>>, vector<1x32xf32>
    %c7_131 = arith.constant 7 : index
    %c64_132 = arith.constant 64 : index
    %217 = vector.load %arg3[%c7_131, %c64_132] : memref<8x128xf32, #tpu.memory_space<vmem>>, vector<1x32xf32>
    tpu.vector_store %arg3[%c7_131, %c64_132], %216 {strides = array<i32>} : memref<8x128xf32, #tpu.memory_space<vmem>>, vector<1x32xf32>,
    %c28_i32_133 = arith.constant 28 : i32
    %218 = arith.addi %0, %c28_i32_133 : i32
    %c3_i32_134 = arith.constant 3 : i32
    %219 = arith.addi %218, %c3_i32_134 : i32
    %220 = arith.index_cast %219 : i32 to index
    %221 = memref.load %arg1[%220] : memref<64xi32, #tpu.memory_space<smem>>
    %222 = arith.index_cast %221 : i32 to index
    %c0_135 = arith.constant 0 : index
    %223 = vector.load %arg2[%222, %c0_135] : memref<56x32xf32, #tpu.memory_space<vmem>>, vector<1x32xf32>
    %c7_136 = arith.constant 7 : index
    %c96_137 = arith.constant 96 : index
    %224 = vector.load %arg3[%c7_136, %c96_137] : memref<8x128xf32, #tpu.memory_space<vmem>>, vector<1x32xf32>
    tpu.vector_store %arg3[%c7_136, %c96_137], %223 {strides = array<i32>} : memref<8x128xf32, #tpu.memory_space<vmem>>, vector<1x32xf32>,
    return
  }
  func.func @transform_0(%arg0: i32, %arg1: memref<64xi32, #tpu.memory_space<smem>>) -> (i32, i32) {
    %c0_i32 = arith.constant 0 : i32
    %c0_i32_0 = arith.constant 0 : i32
    %c0_i32_1 = arith.constant 0 : i32
    return %c0_i32, %c0_i32_0 : i32, i32
  }
  func.func @transform_1(%arg0: i32, %arg1: memref<64xi32, #tpu.memory_space<smem>>) -> (i32, i32) {
    %c0_i32 = arith.constant 0 : i32
    %c0_i32_0 = arith.constant 0 : i32
    return %arg0, %c0_i32 : i32, i32
  }
}

</mosaic_0001>

<llo_original>
// kernel: _device_forward.2
$region0: #{_device_forward.2}
  #allocation0 [shape = 'u32[]', space=smem, size = 0x4, offset = 0x4, fixed_abs, tag = 'smem constant byte address 0x4 - core index']
  #allocation1 [shape = 'u32[144,128]{1,0:T(1,128)}', space=vmem, size = 0x12000, scoped, tag = 'internal scratch']
  #allocation2 [shape = 's32[1]{0}', space=sflag, size = 0x4, scoped, tag = 'scoped memory for _device_forward.2']
  #allocation3 [shape = 'u8[512]{0}', space=smem, size = 0x200, scoped, tag = 'prefetched SMEM operand 0']
  %s0 = inlined_call_operand.vmem [shape: s32[64], index: 0, kind: input, shape index: {}]
  %s1 = inlined_call_operand.vmem [shape: f32[56,32], index: 1, kind: input, shape index: {}]
  %s2 = inlined_call_operand.vmem [shape: f32[16,128], index: 2, kind: output, shape index: {}]
  %s3 = sld [smem:[#allocation0]]
  $region37: #{_device_forward.2} parent=0
    _
  %s5 = ssub.s32 1, %s3
  %s6 = scalar_select 0, %s5, %s3
  %s7 = sshll.u32 %s0, 4
  %s8 = int_to_ptr.vmem [resolvable:$true] %s7
  %10 = dma.vmem_to_smem %s8, 16, [#allocation3], [#allocation2]
  %11 = dma.done [#allocation2], 16
  %12 = sfence
  loop: start=0, step=1, limit=4
  $region2: #{_device_forward.2} parent=0 // loop_pre_header
    _
  $region3: #{_device_forward.2} parent=0 // loop_header
    %s14 = sphi 0, %s18
    %p15 = scmp.ge.s32.totalorder %s14, 4
    %s22 = sphi 0, %s22
    %s24 = sphi 0, %s22
    %s25 = sphi 0, %s24
    %s39 = sphi 0, %s25
    %s45 = sphi 0, %s47
    %s48 = sphi 0, %s45
    %s49 = sphi 0, %s48
    %s65 = sphi 0, %s49
  $region4: #{_device_forward.2} parent=0 // loop_header_branch
    %17 = sbr.rel (%p15) target = $region8
  $region5: #{_device_forward.2} parent=0 // loop_body
    %s19 = ssub.s32 %s14, 1
    %s20 = ssub.s32 %s14, 2
    %s21 = sadd.s32 %s14, 1
    %s23 = sadd.s32 %s22, 1
    %p26 = scmp.eq.s32.totalorder %s14, 1
    %p27 = scmp.ne.s32.totalorder %s22, %s24
    %p28 = scmp.eq.s32.totalorder %s14, 0
    %p29 = por %p27, %p28
    %p30 = scmp.ne.s32.totalorder %s22, %s24
    %p31 = scmp.eq.s32.totalorder %s19, 1
    %p32 = por %p30, %p31
    %p33 = scmp.ne.s32.totalorder %s24, %s25
    %p34 = scmp.eq.s32.totalorder %s19, 0
    %p35 = por %p33, %p34
    %p36 = scmp.ne.s32.totalorder %s24, %s25
    %p37 = scmp.eq.s32.totalorder %s20, 1
    %p38 = por %p36, %p37
    %p40 = scmp.ne.s32.totalorder %s25, %s39
    %p41 = scmp.eq.s32.totalorder %s20, 0
    %p42 = por %p40, %p41
    %s43 = ssub.s32 %s14, %s21
    %p44 = scmp.eq.s32.totalorder %s43, 0
    %s46 = sadd.s32 %s45, 1
    %s47 = scalar_select %p44, %s45, %s46
    %p50 = pneg %p44
    %p51 = scmp.eq.s32.totalorder %s14, 1
    %p52 = por %p50, %p51
    %p53 = scmp.ne.s32.totalorder %s45, %s48
    %p54 = scmp.eq.s32.totalorder %s14, 0
    %p55 = por %p53, %p54
    %p56 = scmp.ne.s32.totalorder %s45, %s48
    %p57 = scmp.eq.s32.totalorder %s19, 1
    %p58 = por %p56, %p57
    %p59 = scmp.ne.s32.totalorder %s48, %s49
    %p60 = scmp.eq.s32.totalorder %s19, 0
    %p61 = por %p59, %p60
    %p62 = scmp.ne.s32.totalorder %s48, %s49
    %p63 = scmp.eq.s32.totalorder %s20, 1
    %p64 = por %p62, %p63
    %p66 = scmp.ne.s32.totalorder %s49, %s65
    %p67 = scmp.eq.s32.totalorder %s20, 0
    %p68 = por %p66, %p67
    %p69 = scmp.le.s32.totalorder 1, %s14
    %p70 = scmp.lt.s32.totalorder %s14, 3
    %p71 = pnand %p69, %p70
    %p72 = pneg %p71
    // Predicated region
    $region9: #{_device_forward.2} parent=5 // pred_check
      _
    $region10: #{_device_forward.2} parent=5 // pred_check_branch
      %74 = sbr.rel (%p71) target = $region12
    $region11: #{_device_forward.2} parent=5 // pred_region
      %s75 = ssub.s32 %s14, 1
      // Predicated region
      $region13: #{_device_forward.2} parent=11 // pred_check
        %p76 = pneg %p35
      $region14: #{_device_forward.2} parent=11 // pred_check_branch
        %78 = sbr.rel (%p76) target = $region16
      $region15: #{_device_forward.2} parent=11 // pred_region
        _
      $region16: #{_device_forward.2} parent=11 // pred_fallthru
        _
    $region12: #{_device_forward.2} parent=5 // pred_fallthru
      _
    %p79 = scmp.lt.s32.totalorder %s14, 2
    // Predicated region
    $region17: #{_device_forward.2} parent=5 // pred_check
      %p80 = pneg %p79
    $region18: #{_device_forward.2} parent=5 // pred_check_branch
      %82 = sbr.rel (%p80) target = $region20
    $region19: #{_device_forward.2} parent=5 // pred_region
      _
    $region20: #{_device_forward.2} parent=5 // pred_fallthru
      _
    %p83 = scmp.le.s32.totalorder 1, %s14
    %p84 = scmp.lt.s32.totalorder %s14, 3
    %p85 = pnand %p83, %p84
    %p86 = pneg %p85
    // Predicated region
    $region21: #{_device_forward.2} parent=5 // pred_check
      _
    $region22: #{_device_forward.2} parent=5 // pred_check_branch
      %88 = sbr.rel (%p85) target = $region24
    $region23: #{_device_forward.2} parent=5 // pred_region
      %s89 = ssub.s32 %s14, 1
      %p90 = pneg %p35
      %p91 = pneg %p32
      %p92 = pneg %p61
      %p93 = pneg %p58
      %p94 = scmp.lt.s32.totalorder %s19, 1
      %s95 = scalar_select %p94, %s19, 1
      %s96 = smul.addr %s95, 8
      %s97 = scalar_lea.vmem %s2, %s96
      %p98 = scmp.lt.s32.totalorder %s19, 1
      %s99 = scalar_select %p98, %s19, 1
      %s100 = smul.addr %s99, 8
      %s101 = scalar_lea.vmem %s2, %s100
      %s102 = smul.u32 %s19, 32
      %s103 = sld [smem:[#allocation3 + %s102]]
      %s104 = scalar_lea.vmem %s1, %s103
      %v105 = vld [vmem:[%s104] sm:$0x1]
      %vm106 = vcmask 253952
      %107 = vst.msk [vmem:[%s101] sm:$0x1] %vm106, %v105
      %s108 = sadd.s32 %s102, 1
      %s109 = sld [smem:[#allocation3 + %s108]]
      %s110 = scalar_lea.vmem %s1, %s109
      %v111 = vld [vmem:[%s110] sm:$0x1]
      %113 = vrot.lane.b32.xlu0 %v111, 32
      %v114 = vpop.permute.xlu0 %113
      %vm116 = vcmask 516352
      %117 = vst.msk [vmem:[%s101] sm:$0x1] %vm116, %v114
      %s118 = sadd.s32 %s102, 2
      %s119 = sld [smem:[#allocation3 + %s118]]
      %s120 = scalar_lea.vmem %s1, %s119
      %v121 = vld [vmem:[%s120] sm:$0x1]
      %123 = vrot.lane.b32.xlu0 %v121, 64
      %v124 = vpop.permute.xlu0 %123
      %vm126 = vcmask 778752
      %127 = vst.msk [vmem:[%s101] sm:$0x1] %vm126, %v124
      %s128 = sadd.s32 %s102, 3
      %s129 = sld [smem:[#allocation3 + %s128]]
      %s130 = scalar_lea.vmem %s1, %s129
      %v131 = vld [vmem:[%s130] sm:$0x1]
      %133 = vrot.lane.b32.xlu0 %v131, 96
      %v134 = vpop.permute.xlu0 %133
      %vm136 = vcmask 1041152
      %137 = vst.msk [vmem:[%s101] sm:$0x1] %vm136, %v134
      %s138 = sadd.s32 %s102, 4
      %s139 = sld [smem:[#allocation3 + %s138]]
      %s140 = scalar_lea.vmem %s1, %s139
      %v141 = vld [vmem:[%s140] sm:$0x1]
      %142 = vst.msk [vmem:[%s101 + $0x1] sm:$0x1] %vm106, %v141
      %s143 = sadd.s32 %s102, 5
      %s144 = sld [smem:[#allocation3 + %s143]]
      %s145 = scalar_lea.vmem %s1, %s144
      %v146 = vld [vmem:[%s145] sm:$0x1]
      %148 = vrot.lane.b32.xlu0 %v146, 32
      %v149 = vpop.permute.xlu0 %148
      %151 = vst.msk [vmem:[%s101 + $0x1] sm:$0x1] %vm116, %v149
      %s152 = sadd.s32 %s102, 6
      %s153 = sld [smem:[#allocation3 + %s152]]
      %s154 = scalar_lea.vmem %s1, %s153
      %v155 = vld [vmem:[%s154] sm:$0x1]
      %157 = vrot.lane.b32.xlu0 %v155, 64
      %v158 = vpop.permute.xlu0 %157
      %160 = vst.msk [vmem:[%s101 + $0x1] sm:$0x1] %vm126, %v158
      %s161 = sadd.s32 %s102, 7
      %s162 = sld [smem:[#allocation3 + %s161]]
      %s163 = scalar_lea.vmem %s1, %s162
      %v164 = vld [vmem:[%s163] sm:$0x1]
      %166 = vrot.lane.b32.xlu0 %v164, 96
      %v167 = vpop.permute.xlu0 %166
      %169 = vst.msk [vmem:[%s101 + $0x1] sm:$0x1] %vm136, %v167
      %s170 = sadd.s32 %s102, 8
      %s171 = sld [smem:[#allocation3 + %s170]]
      %s172 = scalar_lea.vmem %s1, %s171
      %v173 = vld [vmem:[%s172] sm:$0x1]
      %174 = vst.msk [vmem:[%s101 + $0x2] sm:$0x1] %vm106, %v173
      %s175 = sadd.s32 %s102, 9
      %s176 = sld [smem:[#allocation3 + %s175]]
      %s177 = scalar_lea.vmem %s1, %s176
      %v178 = vld [vmem:[%s177] sm:$0x1]
      %180 = vrot.lane.b32.xlu0 %v178, 32
      %v181 = vpop.permute.xlu0 %180
      %183 = vst.msk [vmem:[%s101 + $0x2] sm:$0x1] %vm116, %v181
      %s184 = sadd.s32 %s102, 10
      %s185 = sld [smem:[#allocation3 + %s184]]
      %s186 = scalar_lea.vmem %s1, %s185
      %v187 = vld [vmem:[%s186] sm:$0x1]
      %189 = vrot.lane.b32.xlu0 %v187, 64
      %v190 = vpop.permute.xlu0 %189
      %192 = vst.msk [vmem:[%s101 + $0x2] sm:$0x1] %vm126, %v190
      %s193 = sadd.s32 %s102, 11
      %s194 = sld [smem:[#allocation3 + %s193]]
      %s195 = scalar_lea.vmem %s1, %s194
      %v196 = vld [vmem:[%s195] sm:$0x1]
      %198 = vrot.lane.b32.xlu0 %v196, 96
      %v199 = vpop.permute.xlu0 %198
      %201 = vst.msk [vmem:[%s101 + $0x2] sm:$0x1] %vm136, %v199
      %s202 = sadd.s32 %s102, 12
      %s203 = sld [smem:[#allocation3 + %s202]]
      %s204 = scalar_lea.vmem %s1, %s203
      %v205 = vld [vmem:[%s204] sm:$0x1]
      %206 = vst.msk [vmem:[%s101 + $0x3] sm:$0x1] %vm106, %v205
      %s207 = sadd.s32 %s102, 13
      %s208 = sld [smem:[#allocation3 + %s207]]
      %s209 = scalar_lea.vmem %s1, %s208
      %v210 = vld [vmem:[%s209] sm:$0x1]
      %212 = vrot.lane.b32.xlu0 %v210, 32
      %v213 = vpop.permute.xlu0 %212
      %215 = vst.msk [vmem:[%s101 + $0x3] sm:$0x1] %vm116, %v213
      %s216 = sadd.s32 %s102, 14
      %s217 = sld [smem:[#allocation3 + %s216]]
      %s218 = scalar_lea.vmem %s1, %s217
      %v219 = vld [vmem:[%s218] sm:$0x1]
      %221 = vrot.lane.b32.xlu0 %v219, 64
      %v222 = vpop.permute.xlu0 %221
      %224 = vst.msk [vmem:[%s101 + $0x3] sm:$0x1] %vm126, %v222
      %s225 = sadd.s32 %s102, 15
      %s226 = sld [smem:[#allocation3 + %s225]]
      %s227 = scalar_lea.vmem %s1, %s226
      %v228 = vld [vmem:[%s227] sm:$0x1]
      %230 = vrot.lane.b32.xlu0 %v228, 96
      %v231 = vpop.permute.xlu0 %230
      %233 = vst.msk [vmem:[%s101 + $0x3] sm:$0x1] %vm136, %v231
      %s234 = sadd.s32 %s102, 16
      %s235 = sld [smem:[#allocation3 + %s234]]
      %s236 = scalar_lea.vmem %s1, %s235
      %v237 = vld [vmem:[%s236] sm:$0x1]
      %238 = vst.msk [vmem:[%s101 + $0x4] sm:$0x1] %vm106, %v237
      %s239 = sadd.s32 %s102, 17
      %s240 = sld [smem:[#allocation3 + %s239]]
      %s241 = scalar_lea.vmem %s1, %s240
      %v242 = vld [vmem:[%s241] sm:$0x1]
      %244 = vrot.lane.b32.xlu0 %v242, 32
      %v245 = vpop.permute.xlu0 %244
      %247 = vst.msk [vmem:[%s101 + $0x4] sm:$0x1] %vm116, %v245
      %s248 = sadd.s32 %s102, 18
      %s249 = sld [smem:[#allocation3 + %s248]]
      %s250 = scalar_lea.vmem %s1, %s249
      %v251 = vld [vmem:[%s250] sm:$0x1]
      %253 = vrot.lane.b32.xlu0 %v251, 64
      %v254 = vpop.permute.xlu0 %253
      %256 = vst.msk [vmem:[%s101 + $0x4] sm:$0x1] %vm126, %v254
      %s257 = sadd.s32 %s102, 19
      %s258 = sld [smem:[#allocation3 + %s257]]
      %s259 = scalar_lea.vmem %s1, %s258
      %v260 = vld [vmem:[%s259] sm:$0x1]
      %262 = vrot.lane.b32.xlu0 %v260, 96
      %v263 = vpop.permute.xlu0 %262
      %265 = vst.msk [vmem:[%s101 + $0x4] sm:$0x1] %vm136, %v263
      %s266 = sadd.s32 %s102, 20
      %s267 = sld [smem:[#allocation3 + %s266]]
      %s268 = scalar_lea.vmem %s1, %s267
      %v269 = vld [vmem:[%s268] sm:$0x1]
      %270 = vst.msk [vmem:[%s101 + $0x5] sm:$0x1] %vm106, %v269
      %s271 = sadd.s32 %s102, 21
      %s272 = sld [smem:[#allocation3 + %s271]]
      %s273 = scalar_lea.vmem %s1, %s272
      %v274 = vld [vmem:[%s273] sm:$0x1]
      %276 = vrot.lane.b32.xlu0 %v274, 32
      %v277 = vpop.permute.xlu0 %276
      %279 = vst.msk [vmem:[%s101 + $0x5] sm:$0x1] %vm116, %v277
      %s280 = sadd.s32 %s102, 22
      %s281 = sld [smem:[#allocation3 + %s280]]
      %s282 = scalar_lea.vmem %s1, %s281
      %v283 = vld [vmem:[%s282] sm:$0x1]
      %285 = vrot.lane.b32.xlu0 %v283, 64
      %v286 = vpop.permute.xlu0 %285
      %288 = vst.msk [vmem:[%s101 + $0x5] sm:$0x1] %vm126, %v286
      %s289 = sadd.s32 %s102, 23
      %s290 = sld [smem:[#allocation3 + %s289]]
      %s291 = scalar_lea.vmem %s1, %s290
      %v292 = vld [vmem:[%s291] sm:$0x1]
      %294 = vrot.lane.b32.xlu0 %v292, 96
      %v295 = vpop.permute.xlu0 %294
      %297 = vst.msk [vmem:[%s101 + $0x5] sm:$0x1] %vm136, %v295
      %s298 = sadd.s32 %s102, 24
      %s299 = sld [smem:[#allocation3 + %s298]]
      %s300 = scalar_lea.vmem %s1, %s299
      %v301 = vld [vmem:[%s300] sm:$0x1]
      %302 = vst.msk [vmem:[%s101 + $0x6] sm:$0x1] %vm106, %v301
      %s303 = sadd.s32 %s102, 25
      %s304 = sld [smem:[#allocation3 + %s303]]
      %s305 = scalar_lea.vmem %s1, %s304
      %v306 = vld [vmem:[%s305] sm:$0x1]
      %308 = vrot.lane.b32.xlu0 %v306, 32
      %v309 = vpop.permute.xlu0 %308
      %311 = vst.msk [vmem:[%s101 + $0x6] sm:$0x1] %vm116, %v309
      %s312 = sadd.s32 %s102, 26
      %s313 = sld [smem:[#allocation3 + %s312]]
      %s314 = scalar_lea.vmem %s1, %s313
      %v315 = vld [vmem:[%s314] sm:$0x1]
      %317 = vrot.lane.b32.xlu0 %v315, 64
      %v318 = vpop.permute.xlu0 %317
      %320 = vst.msk [vmem:[%s101 + $0x6] sm:$0x1] %vm126, %v318
      %s321 = sadd.s32 %s102, 27
      %s322 = sld [smem:[#allocation3 + %s321]]
      %s323 = scalar_lea.vmem %s1, %s322
      %v324 = vld [vmem:[%s323] sm:$0x1]
      %326 = vrot.lane.b32.xlu0 %v324, 96
      %v327 = vpop.permute.xlu0 %326
      %329 = vst.msk [vmem:[%s101 + $0x6] sm:$0x1] %vm136, %v327
      %s330 = sadd.s32 %s102, 28
      %s331 = sld [smem:[#allocation3 + %s330]]
      %s332 = scalar_lea.vmem %s1, %s331
      %v333 = vld [vmem:[%s332] sm:$0x1]
      %334 = vst.msk [vmem:[%s101 + $0x7] sm:$0x1] %vm106, %v333
      %s335 = sadd.s32 %s102, 29
      %s336 = sld [smem:[#allocation3 + %s335]]
      %s337 = scalar_lea.vmem %s1, %s336
      %v338 = vld [vmem:[%s337] sm:$0x1]
      %340 = vrot.lane.b32.xlu0 %v338, 32
      %v341 = vpop.permute.xlu0 %340
      %343 = vst.msk [vmem:[%s101 + $0x7] sm:$0x1] %vm116, %v341
      %s344 = sadd.s32 %s102, 30
      %s345 = sld [smem:[#allocation3 + %s344]]
      %s346 = scalar_lea.vmem %s1, %s345
      %v347 = vld [vmem:[%s346] sm:$0x1]
      %349 = vrot.lane.b32.xlu0 %v347, 64
      %v350 = vpop.permute.xlu0 %349
      %352 = vst.msk [vmem:[%s101 + $0x7] sm:$0x1] %vm126, %v350
      %s353 = sadd.s32 %s102, 31
      %s354 = sld [smem:[#allocation3 + %s353]]
      %s355 = scalar_lea.vmem %s1, %s354
      %v356 = vld [vmem:[%s355] sm:$0x1]
      %358 = vrot.lane.b32.xlu0 %v356, 96
      %v359 = vpop.permute.xlu0 %358
      %361 = vst.msk [vmem:[%s101 + $0x7] sm:$0x1] %vm136, %v359
      %p362 = scmp.lt.s32.totalorder %s19, 1
      %s363 = scalar_select %p362, %s19, 1
      %s364 = smul.addr %s363, 8
      %s365 = scalar_lea.vmem %s2, %s364
      // Predicated region
      $region25: #{_device_forward.2} parent=23 // pred_check
        %p366 = pneg %p58
      $region26: #{_device_forward.2} parent=23 // pred_check_branch
        %368 = sbr.rel (%p366) target = $region28
      $region27: #{_device_forward.2} parent=23 // pred_region
        _
      $region28: #{_device_forward.2} parent=23 // pred_fallthru
        _
    $region24: #{_device_forward.2} parent=5 // pred_fallthru
      _
    %p369 = scmp.le.s32.totalorder 2, %s14
    // Predicated region
    $region29: #{_device_forward.2} parent=5 // pred_check
      %p370 = pneg %p369
    $region30: #{_device_forward.2} parent=5 // pred_check_branch
      %372 = sbr.rel (%p370) target = $region32
    $region31: #{_device_forward.2} parent=5 // pred_region
      %s373 = ssub.s32 %s14, 2
      // Predicated region
      $region33: #{_device_forward.2} parent=31 // pred_check
        %p374 = pneg %p64
      $region34: #{_device_forward.2} parent=31 // pred_check_branch
        %376 = sbr.rel (%p374) target = $region36
      $region35: #{_device_forward.2} parent=31 // pred_region
        %p377 = scmp.lt.s32.totalorder %s20, 1
        %s378 = scalar_select %p377, %s20, 1
        %s379 = smul.addr %s378, 8
        %s380 = scalar_lea.vmem %s2, %s379
      $region36: #{_device_forward.2} parent=31 // pred_fallthru
        _
    $region32: #{_device_forward.2} parent=5 // pred_fallthru
      _
  $region6: #{_device_forward.2} parent=0 // loop_footer
    %s18 = sadd.s32 1, %s14
  $region7: #{_device_forward.2} parent=0 // loop_footer_branch
    %13 = sbr.rel target = $region3
  $region8: #{_device_forward.2} parent=0 // loop_exit
    _

// kernel: _device_forward.3
$region0: #{_device_forward.3}
  #allocation0 [shape = 'u32[]', space=smem, size = 0x4, offset = 0x4, fixed_abs, tag = 'smem constant byte address 0x4 - core index']
  #allocation1 [shape = 'u32[144,128]{1,0:T(1,128)}', space=vmem, size = 0x12000, scoped, tag = 'internal scratch']
  #allocation2 [shape = 'f32[16,128]{1,0:T(8,128)}', space=vmem, size = 0x2000, scoped, tag = 'scratch operand']
  %s0 = inlined_call_operand.vmem [shape: bf16[16,512], index: 0, kind: input, shape index: {}]
  %s1 = inlined_call_operand.vmem [shape: bf16[512,128], index: 1, kind: input, shape index: {}]
  %s2 = inlined_call_operand.vmem [shape: f32[1,128], index: 2, kind: input, shape index: {}]
  %s3 = inlined_call_operand.vmem [shape: f32[1,128], index: 3, kind: input, shape index: {}]
  %s4 = inlined_call_operand.vmem [shape: f32[1,128], index: 4, kind: input, shape index: {}]
  %s5 = inlined_call_operand.vmem [shape: bf16[128,384], index: 5, kind: input, shape index: {}]
  %s6 = inlined_call_operand.vmem [shape: f32[1,384], index: 6, kind: input, shape index: {}]
  %s7 = inlined_call_operand.vmem [shape: f32[16,128], index: 7, kind: output, shape index: {0}]
  %s8 = inlined_call_operand.vmem [shape: f32[16,128], index: 8, kind: output, shape index: {1}]
  %9 = xla_tuple %s7, %s8
  %s10 = sld [smem:[#allocation0]]
  $region54: #{_device_forward.3} parent=0
    _
  %s12 = ssub.s32 1, %s10
  %s13 = scalar_select 0, %s12, %s10
  // Predicated region
  $region2: #{_device_forward.3} parent=0 // pred_check
    _
  $region3: #{_device_forward.3} parent=0 // pred_check_branch
    %15 = sbr.rel (0) target = $region5
  $region4: #{_device_forward.3} parent=0 // pred_region
    _
  $region5: #{_device_forward.3} parent=0 // pred_fallthru
    _
  // Predicated region
  $region6: #{_device_forward.3} parent=0 // pred_check
    _
  $region7: #{_device_forward.3} parent=0 // pred_check_branch
    %17 = sbr.rel (0) target = $region9
  $region8: #{_device_forward.3} parent=0 // pred_region
    _
  $region9: #{_device_forward.3} parent=0 // pred_fallthru
    _
  // Predicated region
  $region10: #{_device_forward.3} parent=0 // pred_check
    _
  $region11: #{_device_forward.3} parent=0 // pred_check_branch
    %19 = sbr.rel (0) target = $region13
  $region12: #{_device_forward.3} parent=0 // pred_region
    _
  $region13: #{_device_forward.3} parent=0 // pred_fallthru
    _
  // Predicated region
  $region14: #{_device_forward.3} parent=0 // pred_check
    _
  $region15: #{_device_forward.3} parent=0 // pred_check_branch
    %21 = sbr.rel (0) target = $region17
  $region16: #{_device_forward.3} parent=0 // pred_region
    _
  $region17: #{_device_forward.3} parent=0 // pred_fallthru
    _
  // Predicated region
  $region18: #{_device_forward.3} parent=0 // pred_check
    _
  $region19: #{_device_forward.3} parent=0 // pred_check_branch
    %23 = sbr.rel (0) target = $region21
  $region20: #{_device_forward.3} parent=0 // pred_region
    _
  $region21: #{_device_forward.3} parent=0 // pred_fallthru
    _
  // Predicated region
  $region22: #{_device_forward.3} parent=0 // pred_check
    _
  $region23: #{_device_forward.3} parent=0 // pred_check_branch
    %25 = sbr.rel (0) target = $region25
  $region24: #{_device_forward.3} parent=0 // pred_region
    _
  $region25: #{_device_forward.3} parent=0 // pred_fallthru
    _
  // Predicated region
  $region26: #{_device_forward.3} parent=0 // pred_check
    _
  $region27: #{_device_forward.3} parent=0 // pred_check_branch
    %27 = sbr.rel (0) target = $region29
  $region28: #{_device_forward.3} parent=0 // pred_region
    _
  $region29: #{_device_forward.3} parent=0 // pred_fallthru
    _
  %p29 = scmp.eq.s32.totalorder 0, 0
  // Predicated region
  $region30: #{_device_forward.3} parent=0 // pred_check
    %p30 = pneg %p29
  $region31: #{_device_forward.3} parent=0 // pred_check_branch
    %32 = sbr.rel (%p30) target = $region33
  $region32: #{_device_forward.3} parent=0 // pred_region
    %33 = vst [vmem:[#allocation2] sm:$0xff] 0.0
    %34 = vst [vmem:[#allocation2 + $0x8] sm:$0xff] 0.0
  $region33: #{_device_forward.3} parent=0 // pred_fallthru
    _
  %v35 = vld [vmem:[#allocation2] sm:$0xff]
  %v36 = vld [vmem:[#allocation2 + $0x8] sm:$0xff]
  %v37 = vld [vmem:[%s0] sm:$0xff]
  %v38 = vld [vmem:[%s0 + $0x8] sm:$0xff]
  %v39 = vld [vmem:[%s0 + $0x10] sm:$0xff]
  %v40 = vld [vmem:[%s0 + $0x18] sm:$0xff]
  %v41 = vld [vmem:[%s1] sm:$0xf]
  %v42 = vld [vmem:[%s1 + $0x4] sm:$0xf]
  %v43 = vld [vmem:[%s1 + $0x8] sm:$0xf]
  %v44 = vld [vmem:[%s1 + $0xc] sm:$0xf]
  %v45 = vld [vmem:[%s1 + $0x10] sm:$0xf]
  %v46 = vld [vmem:[%s1 + $0x14] sm:$0xf]
  %v47 = vld [vmem:[%s1 + $0x18] sm:$0xf]
  %v48 = vld [vmem:[%s1 + $0x1c] sm:$0xf]
  %v49 = vld [vmem:[%s1 + $0x20] sm:$0xf]
  %v50 = vld [vmem:[%s1 + $0x24] sm:$0xf]
  %v51 = vld [vmem:[%s1 + $0x28] sm:$0xf]
  %v52 = vld [vmem:[%s1 + $0x2c] sm:$0xf]
  %v53 = vld [vmem:[%s1 + $0x30] sm:$0xf]
  %v54 = vld [vmem:[%s1 + $0x34] sm:$0xf]
  %v55 = vld [vmem:[%s1 + $0x38] sm:$0xf]
  %v56 = vld [vmem:[%s1 + $0x3c] sm:$0xf]
  %v57 = vld [vmem:[%s1 + $0x40] sm:$0xf]
  %v58 = vld [vmem:[%s1 + $0x44] sm:$0xf]
  %v59 = vld [vmem:[%s1 + $0x48] sm:$0xf]
  %v60 = vld [vmem:[%s1 + $0x4c] sm:$0xf]
  %v61 = vld [vmem:[%s1 + $0x50] sm:$0xf]
  %v62 = vld [vmem:[%s1 + $0x54] sm:$0xf]
  %v63 = vld [vmem:[%s1 + $0x58] sm:$0xf]
  %v64 = vld [vmem:[%s1 + $0x5c] sm:$0xf]
  %v65 = vld [vmem:[%s1 + $0x60] sm:$0xf]
  %v66 = vld [vmem:[%s1 + $0x64] sm:$0xf]
  %v67 = vld [vmem:[%s1 + $0x68] sm:$0xf]
  %v68 = vld [vmem:[%s1 + $0x6c] sm:$0xf]
  %v69 = vld [vmem:[%s1 + $0x70] sm:$0xf]
  %v70 = vld [vmem:[%s1 + $0x74] sm:$0xf]
  %v71 = vld [vmem:[%s1 + $0x78] sm:$0xf]
  %v72 = vld [vmem:[%s1 + $0x7c] sm:$0xf]
  %v73 = vld [vmem:[%s1 + $0x80] sm:$0xf]
  %v74 = vld [vmem:[%s1 + $0x84] sm:$0xf]
  %v75 = vld [vmem:[%s1 + $0x88] sm:$0xf]
  %v76 = vld [vmem:[%s1 + $0x8c] sm:$0xf]
  %v77 = vld [vmem:[%s1 + $0x90] sm:$0xf]
  %v78 = vld [vmem:[%s1 + $0x94] sm:$0xf]
  %v79 = vld [vmem:[%s1 + $0x98] sm:$0xf]
  %v80 = vld [vmem:[%s1 + $0x9c] sm:$0xf]
  %v81 = vld [vmem:[%s1 + $0xa0] sm:$0xf]
  %v82 = vld [vmem:[%s1 + $0xa4] sm:$0xf]
  %v83 = vld [vmem:[%s1 + $0xa8] sm:$0xf]
  %v84 = vld [vmem:[%s1 + $0xac] sm:$0xf]
  %v85 = vld [vmem:[%s1 + $0xb0] sm:$0xf]
  %v86 = vld [vmem:[%s1 + $0xb4] sm:$0xf]
  %v87 = vld [vmem:[%s1 + $0xb8] sm:$0xf]
  %v88 = vld [vmem:[%s1 + $0xbc] sm:$0xf]
  %v89 = vld [vmem:[%s1 + $0xc0] sm:$0xf]
  %v90 = vld [vmem:[%s1 + $0xc4] sm:$0xf]
  %v91 = vld [vmem:[%s1 + $0xc8] sm:$0xf]
  %v92 = vld [vmem:[%s1 + $0xcc] sm:$0xf]
  %v93 = vld [vmem:[%s1 + $0xd0] sm:$0xf]
  %v94 = vld [vmem:[%s1 + $0xd4] sm:$0xf]
  %v95 = vld [vmem:[%s1 + $0xd8] sm:$0xf]
  %v96 = vld [vmem:[%s1 + $0xdc] sm:$0xf]
  %v97 = vld [vmem:[%s1 + $0xe0] sm:$0xf]
  %v98 = vld [vmem:[%s1 + $0xe4] sm:$0xf]
  %v99 = vld [vmem:[%s1 + $0xe8] sm:$0xf]
  %v100 = vld [vmem:[%s1 + $0xec] sm:$0xf]
  %v101 = vld [vmem:[%s1 + $0xf0] sm:$0xf]
  %v102 = vld [vmem:[%s1 + $0xf4] sm:$0xf]
  %v103 = vld [vmem:[%s1 + $0xf8] sm:$0xf]
  %v104 = vld [vmem:[%s1 + $0xfc] sm:$0xf]
  %v109 = vunpack.c.l.b16 %v37
  %v110 = vunpack.c.h.b16 %v37
  %v111 = vunpack.c.l.b16 %v38
  %v112 = vunpack.c.h.b16 %v38
  %v113 = vunpack.c.l.b16 %v39
  %v114 = vunpack.c.h.b16 %v39
  %v115 = vunpack.c.l.b16 %v40
  %v116 = vunpack.c.h.b16 %v40
  %v117 = vpack.c.b16 %v113, %v109
  %v118 = vpack.c.b16 %v114, %v110
  %v119 = vpack.c.b16 %v115, %v111
  %v120 = vpack.c.b16 %v116, %v112
  %v189 = vunpack.c.l.b16 %v41
  %v190 = vunpack.c.l.b16 %v42
  %v191 = vunpack.c.l.b16 %v43
  %v192 = vunpack.c.l.b16 %v44
  %v193 = vunpack.c.l.b16 %v45
  %v194 = vunpack.c.l.b16 %v46
  %v195 = vunpack.c.l.b16 %v47
  %v196 = vunpack.c.l.b16 %v48
  %v197 = vunpack.c.l.b16 %v49
  %v198 = vunpack.c.l.b16 %v50
  %v199 = vunpack.c.l.b16 %v51
  %v200 = vunpack.c.l.b16 %v52
  %v201 = vunpack.c.l.b16 %v53
  %v202 = vunpack.c.l.b16 %v54
  %v203 = vunpack.c.l.b16 %v55
  %v204 = vunpack.c.l.b16 %v56
  %v205 = vunpack.c.l.b16 %v57
  %v206 = vunpack.c.l.b16 %v58
  %v207 = vunpack.c.l.b16 %v59
  %v208 = vunpack.c.l.b16 %v60
  %v209 = vunpack.c.l.b16 %v61
  %v210 = vunpack.c.l.b16 %v62
  %v211 = vunpack.c.l.b16 %v63
  %v212 = vunpack.c.l.b16 %v64
  %v213 = vunpack.c.l.b16 %v65
  %v214 = vunpack.c.l.b16 %v66
  %v215 = vunpack.c.l.b16 %v67
  %v216 = vunpack.c.l.b16 %v68
  %v217 = vunpack.c.l.b16 %v69
  %v218 = vunpack.c.l.b16 %v70
  %v219 = vunpack.c.l.b16 %v71
  %v220 = vunpack.c.l.b16 %v72
  %v221 = vunpack.c.l.b16 %v73
  %v222 = vunpack.c.l.b16 %v74
  %v223 = vunpack.c.l.b16 %v75
  %v224 = vunpack.c.l.b16 %v76
  %v225 = vunpack.c.l.b16 %v77
  %v226 = vunpack.c.l.b16 %v78
  %v227 = vunpack.c.l.b16 %v79
  %v228 = vunpack.c.l.b16 %v80
  %v229 = vunpack.c.l.b16 %v81
  %v230 = vunpack.c.l.b16 %v82
  %v231 = vunpack.c.l.b16 %v83
  %v232 = vunpack.c.l.b16 %v84
  %v233 = vunpack.c.l.b16 %v85
  %v234 = vunpack.c.l.b16 %v86
  %v235 = vunpack.c.l.b16 %v87
  %v236 = vunpack.c.l.b16 %v88
  %v237 = vunpack.c.l.b16 %v89
  %v238 = vunpack.c.l.b16 %v90
  %v239 = vunpack.c.l.b16 %v91
  %v240 = vunpack.c.l.b16 %v92
  %v241 = vunpack.c.l.b16 %v93
  %v242 = vunpack.c.l.b16 %v94
  %v243 = vunpack.c.l.b16 %v95
  %v244 = vunpack.c.l.b16 %v96
  %v245 = vunpack.c.l.b16 %v97
  %v246 = vunpack.c.l.b16 %v98
  %v247 = vunpack.c.l.b16 %v99
  %v248 = vunpack.c.l.b16 %v100
  %v249 = vunpack.c.l.b16 %v101
  %v250 = vunpack.c.l.b16 %v102
  %v251 = vunpack.c.l.b16 %v103
  %v252 = vunpack.c.l.b16 %v104
  %v253 = vpack.c.b16 %v190, %v189
  %v254 = vpack.c.b16 %v192, %v191
  %v255 = vpack.c.b16 %v194, %v193
  %v256 = vpack.c.b16 %v196, %v195
  %v257 = vpack.c.b16 %v198, %v197
  %v258 = vpack.c.b16 %v200, %v199
  %v259 = vpack.c.b16 %v202, %v201
  %v260 = vpack.c.b16 %v204, %v203
  %v261 = vpack.c.b16 %v206, %v205
  %v262 = vpack.c.b16 %v208, %v207
  %v263 = vpack.c.b16 %v210, %v209
  %v264 = vpack.c.b16 %v212, %v211
  %v265 = vpack.c.b16 %v214, %v213
  %v266 = vpack.c.b16 %v216, %v215
  %v267 = vpack.c.b16 %v218, %v217
  %v268 = vpack.c.b16 %v220, %v219
  %v269 = vpack.c.b16 %v222, %v221
  %v270 = vpack.c.b16 %v224, %v223
  %v271 = vpack.c.b16 %v226, %v225
  %v272 = vpack.c.b16 %v228, %v227
  %v273 = vpack.c.b16 %v230, %v229
  %v274 = vpack.c.b16 %v232, %v231
  %v275 = vpack.c.b16 %v234, %v233
  %v276 = vpack.c.b16 %v236, %v235
  %v277 = vpack.c.b16 %v238, %v237
  %v278 = vpack.c.b16 %v240, %v239
  %v279 = vpack.c.b16 %v242, %v241
  %v280 = vpack.c.b16 %v244, %v243
  %v281 = vpack.c.b16 %v246, %v245
  %v282 = vpack.c.b16 %v248, %v247
  %v283 = vpack.c.b16 %v250, %v249
  %v284 = vpack.c.b16 %v252, %v251
  %317 = vmatprep.subr.bf16.mxu0 0
  %318 = vmatpush1.bf16.msra.mxu0 %v253
  %319 = vmatprep.subr.bf16.mxu0 0
  %320 = vmatpush1.bf16.msra.mxu0 %v254
  %321 = vmatprep.subr.bf16.mxu0 0
  %322 = vmatpush1.bf16.msra.mxu0 %v255
  %323 = vmatprep.subr.bf16.mxu0 0
  %324 = vmatpush1.bf16.msra.mxu0 %v256
  %325 = vmatprep.subr.bf16.mxu0 0
  %326 = vmatpush1.bf16.msra.mxu0 %v257
  %327 = vmatprep.subr.bf16.mxu0 0
  %328 = vmatpush1.bf16.msra.mxu0 %v258
  %329 = vmatprep.subr.bf16.mxu0 0
  %330 = vmatpush1.bf16.msra.mxu0 %v259
  %331 = vmatprep.subr.bf16.mxu0 0
  %332 = vmatpush1.bf16.msra.mxu0 %v260
  %333 = vmatprep.subr.bf16.mxu0 0
  %334 = vmatpush1.bf16.msra.mxu0 %v261
  %335 = vmatprep.subr.bf16.mxu0 0
  %336 = vmatpush1.bf16.msra.mxu0 %v262
  %337 = vmatprep.subr.bf16.mxu0 0
  %338 = vmatpush1.bf16.msra.mxu0 %v263
  %339 = vmatprep.subr.bf16.mxu0 0
  %340 = vmatpush1.bf16.msra.mxu0 %v264
  %341 = vmatprep.subr.bf16.mxu0 0
  %342 = vmatpush1.bf16.msra.mxu0 %v265
  %343 = vmatprep.subr.bf16.mxu0 0
  %344 = vmatpush1.bf16.msra.mxu0 %v266
  %345 = vmatprep.subr.bf16.mxu0 0
  %346 = vmatpush1.bf16.msra.mxu0 %v267
  %347 = vmatprep.subr.bf16.mxu0 0
  %348 = vmatpush1.bf16.msra.mxu0 %v268
  %349 = vmatprep.mubr.bf16.mxu0 %v118
  %350 = vmatmul.mubr.bf16.gmra.mrb[0].mxu0 %v117
  %v351 = vpop.f32.mrb[0].mxu0
  %v352 = vadd.f32 0.0, %v351
  %v353 = vpop.f32.mrb[0].mxu0
  %v354 = vpop.f32.mrb[0].mxu0
  %v355 = vadd.f32 0.0, %v354
  %v356 = vpop.f32.mrb[0].mxu0
  %357 = vdwg.mxu0
  %358 = vmatprep.subr.bf16.mxu0 0
  %359 = vmatpush1.bf16.msra.mxu0 %v269
  %360 = vmatprep.subr.bf16.mxu0 0
  %361 = vmatpush1.bf16.msra.mxu0 %v270
  %362 = vmatprep.subr.bf16.mxu0 0
  %363 = vmatpush1.bf16.msra.mxu0 %v271
  %364 = vmatprep.subr.bf16.mxu0 0
  %365 = vmatpush1.bf16.msra.mxu0 %v272
  %366 = vmatprep.subr.bf16.mxu0 0
  %367 = vmatpush1.bf16.msra.mxu0 %v273
  %368 = vmatprep.subr.bf16.mxu0 0
  %369 = vmatpush1.bf16.msra.mxu0 %v274
  %370 = vmatprep.subr.bf16.mxu0 0
  %371 = vmatpush1.bf16.msra.mxu0 %v275
  %372 = vmatprep.subr.bf16.mxu0 0
  %373 = vmatpush1.bf16.msra.mxu0 %v276
  %374 = vmatprep.subr.bf16.mxu0 0
  %375 = vmatpush1.bf16.msra.mxu0 %v277
  %376 = vmatprep.subr.bf16.mxu0 0
  %377 = vmatpush1.bf16.msra.mxu0 %v278
  %378 = vmatprep.subr.bf16.mxu0 0
  %379 = vmatpush1.bf16.msra.mxu0 %v279
  %380 = vmatprep.subr.bf16.mxu0 0
  %381 = vmatpush1.bf16.msra.mxu0 %v280
  %382 = vmatprep.subr.bf16.mxu0 0
  %383 = vmatpush1.bf16.msra.mxu0 %v281
  %384 = vmatprep.subr.bf16.mxu0 0
  %385 = vmatpush1.bf16.msra.mxu0 %v282
  %386 = vmatprep.subr.bf16.mxu0 0
  %387 = vmatpush1.bf16.msra.mxu0 %v283
  %388 = vmatprep.subr.bf16.mxu0 0
  %389 = vmatpush1.bf16.msra.mxu0 %v284
  %390 = vmatprep.mubr.bf16.mxu0 %v120
  %391 = vmatmul.mubr.bf16.gmra.mrb[0].mxu0 %v119
  %v392 = vpop.f32.mrb[0].mxu0
  %v393 = vadd.f32 %v352, %v392
  %v394 = vpop.f32.mrb[0].mxu0
  %v395 = vpop.f32.mrb[0].mxu0
  %v396 = vadd.f32 %v355, %v395
  %v397 = vpop.f32.mrb[0].mxu0
  %398 = vdwg.mxu0
  %v399 = vadd.f32 %v35, %v393
  %v400 = vadd.f32 %v36, %v396
  %401 = vst [vmem:[#allocation2] sm:$0xff] %v399
  %402 = vst [vmem:[#allocation2 + $0x8] sm:$0xff] %v400
  // Predicated region
  $region34: #{_device_forward.3} parent=0 // pred_check
    %p403 = pneg %p29
  $region35: #{_device_forward.3} parent=0 // pred_check_branch
    %405 = sbr.rel (%p403) target = $region37
  $region36: #{_device_forward.3} parent=0 // pred_region
    %v406 = vld [vmem:[#allocation2] sm:$0xff]
    %v407 = vld [vmem:[#allocation2 + $0x8] sm:$0xff]
    %v408 = vld [vmem:[%s2] sm:$0x1]
    %v410 = vlaneseq
    %v411 = vshrl.u32 %v410, 7
    %v412 = vsub.s32 0, %v411
    %v413 = vrot.slane %v408, %v412
    %v415 = vadd.f32 %v406, %v413
    %v416 = vadd.f32 %v407, %v413
    %v417 = vlaneseq
    %v418 = vshrl.u32 %v417, 7
    %v419 = vadd.s32 %v418, 8
    %vm420 = vcmp.lt.s32.totalorder %v418, 4
    %vm421 = vcmp.lt.s32.totalorder %v419, 4
    %v422 = vsel %vm420, 1, 0
    %v423 = vsel %vm421, 1, 0
    %v424 = vcvt.s32.f32 %v422
    %v425 = vcvt.s32.f32 %v423
    %v426 = vmul.f32 %v415, %v424
    %v427 = vmul.f32 %v416, %v425
    %v428 = vadd.f32 %v426, %v427
    %v429 = vrot.slane %v428, 4
    %v430 = vadd.f32 %v428, %v429
    %v431 = vrot.slane %v430, 2
    %v432 = vadd.f32 %v430, %v431
    %v433 = vrot.slane %v432, 1
    %v434 = vadd.f32 %v432, %v433
    %v435 = vmul.f32 %v434, 0.25
    %v436 = vsub.f32 %v415, %v435
    %v437 = vsub.f32 %v416, %v435
    %v438 = vmul.f32 %v436, %v424
    %v439 = vmul.f32 %v437, %v425
    %v440 = vmul.f32 %v438, %v438
    %v441 = vmul.f32 %v439, %v439
    %v442 = vadd.f32 %v440, %v441
    %v443 = vrot.slane %v442, 4
    %v444 = vadd.f32 %v442, %v443
    %v445 = vrot.slane %v444, 2
    %v446 = vadd.f32 %v444, %v445
    %v447 = vrot.slane %v446, 1
    %v448 = vadd.f32 %v446, %v447
    %v449 = vmul.f32 %v448, 0.25
    %v450 = vld [vmem:[%s3] sm:$0x1]
    %v452 = vlaneseq
    %v453 = vshrl.u32 %v452, 7
    %v454 = vsub.s32 0, %v453
    %v455 = vrot.slane %v450, %v454
    %v457 = vmul.f32 %v455, %v436
    %v458 = vmul.f32 %v455, %v437
    %v459 = vadd.f32 %v449, 1e-05
    %v460 = vrsqrt.pop %v459
    %v461 = vmul.f32 %v457, %v460
    %v462 = vmul.f32 %v458, %v460
    %v463 = vld [vmem:[%s4] sm:$0x1]
    %v465 = vlaneseq
    %v466 = vshrl.u32 %v465, 7
    %v467 = vsub.s32 0, %v466
    %v468 = vrot.slane %v463, %v467
    %v470 = vadd.f32 %v461, %v468
    %v471 = vadd.f32 %v462, %v468
    %v472 = vpack.c.bf16 %v471, %v470
    %v473 = vld [vmem:[%s5] sm:$0xff]
    %v474 = vld [vmem:[%s5 + $0x8] sm:$0xf]
    %v475 = vld [vmem:[%s5 + $0xc] sm:$0xff]
    %v476 = vld [vmem:[%s5 + $0x14] sm:$0xf]
    %v477 = vld [vmem:[%s5 + $0x18] sm:$0xff]
    %v478 = vld [vmem:[%s5 + $0x20] sm:$0xf]
    %v479 = vld [vmem:[%s5 + $0x24] sm:$0xff]
    %v480 = vld [vmem:[%s5 + $0x2c] sm:$0xf]
    %v481 = vld [vmem:[%s5 + $0x30] sm:$0xff]
    %v482 = vld [vmem:[%s5 + $0x38] sm:$0xf]
    %v483 = vld [vmem:[%s5 + $0x3c] sm:$0xff]
    %v484 = vld [vmem:[%s5 + $0x44] sm:$0xf]
    %v485 = vld [vmem:[%s5 + $0x48] sm:$0xff]
    %v486 = vld [vmem:[%s5 + $0x50] sm:$0xf]
    %v487 = vld [vmem:[%s5 + $0x54] sm:$0xff]
    %v488 = vld [vmem:[%s5 + $0x5c] sm:$0xf]
    %v489 = vld [vmem:[%s5 + $0x60] sm:$0xff]
    %v490 = vld [vmem:[%s5 + $0x68] sm:$0xf]
    %v491 = vld [vmem:[%s5 + $0x6c] sm:$0xff]
    %v492 = vld [vmem:[%s5 + $0x74] sm:$0xf]
    %v493 = vld [vmem:[%s5 + $0x78] sm:$0xff]
    %v494 = vld [vmem:[%s5 + $0x80] sm:$0xf]
    %v495 = vld [vmem:[%s5 + $0x84] sm:$0xff]
    %v496 = vld [vmem:[%s5 + $0x8c] sm:$0xf]
    %v497 = vld [vmem:[%s5 + $0x90] sm:$0xff]
    %v498 = vld [vmem:[%s5 + $0x98] sm:$0xf]
    %v499 = vld [vmem:[%s5 + $0x9c] sm:$0xff]
    %v500 = vld [vmem:[%s5 + $0xa4] sm:$0xf]
    %v501 = vld [vmem:[%s5 + $0xa8] sm:$0xff]
    %v502 = vld [vmem:[%s5 + $0xb0] sm:$0xf]
    %v503 = vld [vmem:[%s5 + $0xb4] sm:$0xff]
    %v504 = vld [vmem:[%s5 + $0xbc] sm:$0xf]
    %v505 = vld [vmem:[%s6] sm:$0x7]
    %v507 = vlaneseq
    %v508 = vshrl.u32 %v507, 7
    %v509 = vsub.s32 0, %v508
    %v510 = vrot.slane %v505, %v509
    %v511 = vlaneseq
    %v512 = vshrl.u32 %v511, 7
    %v513 = vsub.s32 1, %v512
    %v514 = vrot.slane %v505, %v513
    %v515 = vlaneseq
    %v516 = vshrl.u32 %v515, 7
    %v517 = vsub.s32 2, %v516
    %v518 = vrot.slane %v505, %v517
    %v554 = vunpack.c.l.b16 %v473
    %v555 = vunpack.c.h.b16 %v473
    %v556 = vunpack.c.l.b16 %v474
    %v557 = vunpack.c.l.b16 %v475
    %v558 = vunpack.c.h.b16 %v475
    %v559 = vunpack.c.l.b16 %v476
    %v560 = vunpack.c.l.b16 %v477
    %v561 = vunpack.c.h.b16 %v477
    %v562 = vunpack.c.l.b16 %v478
    %v563 = vunpack.c.l.b16 %v479
    %v564 = vunpack.c.h.b16 %v479
    %v565 = vunpack.c.l.b16 %v480
    %v566 = vunpack.c.l.b16 %v481
    %v567 = vunpack.c.h.b16 %v481
    %v568 = vunpack.c.l.b16 %v482
    %v569 = vunpack.c.l.b16 %v483
    %v570 = vunpack.c.h.b16 %v483
    %v571 = vunpack.c.l.b16 %v484
    %v572 = vunpack.c.l.b16 %v485
    %v573 = vunpack.c.h.b16 %v485
    %v574 = vunpack.c.l.b16 %v486
    %v575 = vunpack.c.l.b16 %v487
    %v576 = vunpack.c.h.b16 %v487
    %v577 = vunpack.c.l.b16 %v488
    %v578 = vunpack.c.l.b16 %v489
    %v579 = vunpack.c.h.b16 %v489
    %v580 = vunpack.c.l.b16 %v490
    %v581 = vunpack.c.l.b16 %v491
    %v582 = vunpack.c.h.b16 %v491
    %v583 = vunpack.c.l.b16 %v492
    %v584 = vunpack.c.l.b16 %v493
    %v585 = vunpack.c.h.b16 %v493
    %v586 = vunpack.c.l.b16 %v494
    %v587 = vunpack.c.l.b16 %v495
    %v588 = vunpack.c.h.b16 %v495
    %v589 = vunpack.c.l.b16 %v496
    %v590 = vunpack.c.l.b16 %v497
    %v591 = vunpack.c.h.b16 %v497
    %v592 = vunpack.c.l.b16 %v498
    %v593 = vunpack.c.l.b16 %v499
    %v594 = vunpack.c.h.b16 %v499
    %v595 = vunpack.c.l.b16 %v500
    %v596 = vunpack.c.l.b16 %v501
    %v597 = vunpack.c.h.b16 %v501
    %v598 = vunpack.c.l.b16 %v502
    %v599 = vunpack.c.l.b16 %v503
    %v600 = vunpack.c.h.b16 %v503
    %v601 = vunpack.c.l.b16 %v504
    %v602 = vpack.c.b16 %v557, %v554
    %v603 = vpack.c.b16 %v558, %v555
    %v604 = vpack.c.b16 %v559, %v556
    %v605 = vpack.c.b16 %v563, %v560
    %v606 = vpack.c.b16 %v564, %v561
    %v607 = vpack.c.b16 %v565, %v562
    %v608 = vpack.c.b16 %v569, %v566
    %v609 = vpack.c.b16 %v570, %v567
    %v610 = vpack.c.b16 %v571, %v568
    %v611 = vpack.c.b16 %v575, %v572
    %v612 = vpack.c.b16 %v576, %v573
    %v613 = vpack.c.b16 %v577, %v574
    %v614 = vpack.c.b16 %v581, %v578
    %v615 = vpack.c.b16 %v582, %v579
    %v616 = vpack.c.b16 %v583, %v580
    %v617 = vpack.c.b16 %v587, %v584
    %v618 = vpack.c.b16 %v588, %v585
    %v619 = vpack.c.b16 %v589, %v586
    %v620 = vpack.c.b16 %v593, %v590
    %v621 = vpack.c.b16 %v594, %v591
    %v622 = vpack.c.b16 %v595, %v592
    %v623 = vpack.c.b16 %v599, %v596
    %v624 = vpack.c.b16 %v600, %v597
    %v625 = vpack.c.b16 %v601, %v598
    %650 = vmatprep.subr.bf16.mxu0 %v603
    %651 = vmatpush1.bf16.msra.mxu0 %v602
    %652 = vmatprep.subr.bf16.mxu0 %v606
    %653 = vmatpush1.bf16.msra.mxu0 %v605
    %654 = vmatprep.subr.bf16.mxu0 %v609
    %655 = vmatpush1.bf16.msra.mxu0 %v608
    %656 = vmatprep.subr.bf16.mxu0 %v612
    %657 = vmatpush1.bf16.msra.mxu0 %v611
    %658 = vmatprep.subr.bf16.mxu0 %v615
    %659 = vmatpush1.bf16.msra.mxu0 %v614
    %660 = vmatprep.subr.bf16.mxu0 %v618
    %661 = vmatpush1.bf16.msra.mxu0 %v617
    %662 = vmatprep.subr.bf16.mxu0 %v621
    %663 = vmatpush1.bf16.msra.mxu0 %v620
    %664 = vmatprep.subr.bf16.mxu0 %v624
    %665 = vmatpush1.bf16.msra.mxu0 %v623
    %666 = vmatprep.subr.bf16.mxu0 0
    %667 = vmatpush1.bf16.msra.mxu0 0
    %668 = vmatprep.subr.bf16.mxu0 0
    %669 = vmatpush1.bf16.msra.mxu0 0
    %670 = vmatprep.subr.bf16.mxu0 0
    %671 = vmatpush1.bf16.msra.mxu0 0
    %672 = vmatprep.subr.bf16.mxu0 0
    %673 = vmatpush1.bf16.msra.mxu0 0
    %674 = vmatprep.subr.bf16.mxu0 0
    %675 = vmatpush1.bf16.msra.mxu0 0
    %676 = vmatprep.subr.bf16.mxu0 0
    %677 = vmatpush1.bf16.msra.mxu0 0
    %678 = vmatprep.subr.bf16.mxu0 0
    %679 = vmatpush1.bf16.msra.mxu0 0
    %680 = vmatprep.subr.bf16.mxu0 0
    %681 = vmatpush1.bf16.msra.mxu0 0
    %682 = vmatprep.mubr.bf16.mxu0 0
    %683 = vmatmul.mubr.bf16.gmra.mrb[0].mxu0 %v472
    %v684 = vpop.f32.mrb[0].mxu0
    %v685 = vadd.f32 %v510, %v684
    %v686 = vpop.f32.mrb[0].mxu0
    %v687 = vadd.f32 %v514, %v686
    %v688 = vpop.f32.mrb[0].mxu0
    %v689 = vadd.f32 %v510, %v688
    %v690 = vpop.f32.mrb[0].mxu0
    %v691 = vadd.f32 %v514, %v690
    %692 = vdwg.mxu0
    %693 = vmatprep.subr.bf16.mxu0 0
    %694 = vmatpush1.bf16.msra.mxu0 %v604
    %695 = vmatprep.subr.bf16.mxu0 0
    %696 = vmatpush1.bf16.msra.mxu0 %v607
    %697 = vmatprep.subr.bf16.mxu0 0
    %698 = vmatpush1.bf16.msra.mxu0 %v610
    %699 = vmatprep.subr.bf16.mxu0 0
    %700 = vmatpush1.bf16.msra.mxu0 %v613
    %701 = vmatprep.subr.bf16.mxu0 0
    %702 = vmatpush1.bf16.msra.mxu0 %v616
    %703 = vmatprep.subr.bf16.mxu0 0
    %704 = vmatpush1.bf16.msra.mxu0 %v619
    %705 = vmatprep.subr.bf16.mxu0 0
    %706 = vmatpush1.bf16.msra.mxu0 %v622
    %707 = vmatprep.subr.bf16.mxu0 0
    %708 = vmatpush1.bf16.msra.mxu0 %v625
    %709 = vmatprep.subr.bf16.mxu0 0
    %710 = vmatpush1.bf16.msra.mxu0 0
    %711 = vmatprep.subr.bf16.mxu0 0
    %712 = vmatpush1.bf16.msra.mxu0 0
    %713 = vmatprep.subr.bf16.mxu0 0
    %714 = vmatpush1.bf16.msra.mxu0 0
    %715 = vmatprep.subr.bf16.mxu0 0
    %716 = vmatpush1.bf16.msra.mxu0 0
    %717 = vmatprep.subr.bf16.mxu0 0
    %718 = vmatpush1.bf16.msra.mxu0 0
    %719 = vmatprep.subr.bf16.mxu0 0
    %720 = vmatpush1.bf16.msra.mxu0 0
    %721 = vmatprep.subr.bf16.mxu0 0
    %722 = vmatpush1.bf16.msra.mxu0 0
    %723 = vmatprep.subr.bf16.mxu0 0
    %724 = vmatpush1.bf16.msra.mxu0 0
    %725 = vmatprep.mubr.bf16.mxu0 0
    %726 = vmatmul.mubr.bf16.gmra.mrb[0].mxu0 %v472
    %v727 = vpop.f32.mrb[0].mxu0
    %v728 = vadd.f32 %v518, %v727
    %v729 = vpop.f32.mrb[0].mxu0
    %v730 = vpop.f32.mrb[0].mxu0
    %v731 = vadd.f32 %v518, %v730
    %v732 = vpop.f32.mrb[0].mxu0
    %733 = vdwg.mxu0
    %v734 = vxor.u32 %v685, 2147483648
    %v735 = vxor.u32 %v689, 2147483648
    %v736 = vmul.f32 %v734, 1.442695
    %v737 = vpow.pop %v736
    %v738 = vmul.f32 %v735, 1.442695
    %v739 = vpow.pop %v738
    %v740 = vadd.f32 %v737, 1.0
    %v741 = vadd.f32 %v739, 1.0
    %v742 = vrcp.pop %v740
    %v743 = vmul.f32 1.0, %v742
    %v744 = vrcp.pop %v741
    %v745 = vmul.f32 1.0, %v744
    %v746 = vtanh.pop %v687
    %v747 = vtanh.pop %v691
    %v748 = vxor.u32 %v728, 2147483648
    %v749 = vxor.u32 %v731, 2147483648
    %v750 = vmul.f32 %v748, 1.442695
    %v751 = vpow.pop %v750
    %v752 = vmul.f32 %v749, 1.442695
    %v753 = vpow.pop %v752
    %v754 = vadd.f32 %v751, 1.0
    %v755 = vadd.f32 %v753, 1.0
    %v756 = vrcp.pop %v754
    %v757 = vmul.f32 1.0, %v756
    %v758 = vrcp.pop %v755
    %v759 = vmul.f32 1.0, %v758
    %v760 = vmul.f32 %v743, %v746
    %v761 = vmul.f32 %v745, %v747
    %v762 = vtanh.pop %v760
    %v763 = vtanh.pop %v761
    %v764 = vmul.f32 %v757, %v762
    %v765 = vmul.f32 %v759, %v763
    %766 = vst [vmem:[%s7] sm:$0xff] %v764
    %767 = vst [vmem:[%s7 + $0x8] sm:$0xff] %v765
    %768 = vst [vmem:[%s8] sm:$0xff] %v760
    %769 = vst [vmem:[%s8 + $0x8] sm:$0xff] %v761
  $region37: #{_device_forward.3} parent=0 // pred_fallthru
    _
  // Predicated region
  $region38: #{_device_forward.3} parent=0 // pred_check
    _
  $region39: #{_device_forward.3} parent=0 // pred_check_branch
    %771 = sbr.rel (0) target = $region41
  $region40: #{_device_forward.3} parent=0 // pred_region
    _
  $region41: #{_device_forward.3} parent=0 // pred_fallthru
    _
  // Predicated region
  $region42: #{_device_forward.3} parent=0 // pred_check
    _
  $region43: #{_device_forward.3} parent=0 // pred_check_branch
    %773 = sbr.rel (0) target = $region45
  $region44: #{_device_forward.3} parent=0 // pred_region
    _
  $region45: #{_device_forward.3} parent=0 // pred_fallthru
    _
  // Predicated region
  $region46: #{_device_forward.3} parent=0 // pred_check
    _
  $region47: #{_device_forward.3} parent=0 // pred_check_branch
    %775 = sbr.rel (0) target = $region49
  $region48: #{_device_forward.3} parent=0 // pred_region
    _
  $region49: #{_device_forward.3} parent=0 // pred_fallthru
    _
  // Predicated region
  $region50: #{_device_forward.3} parent=0 // pred_check
    _
  $region51: #{_device_forward.3} parent=0 // pred_check_branch
    %777 = sbr.rel (0) target = $region53
  $region52: #{_device_forward.3} parent=0 // pred_region
    _
  $region53: #{_device_forward.3} parent=0 // pred_fallthru
    _

</llo_original>
